<compile_context>
chip_gen: v7x
topology: tpu7x:2x2x1
jax: 0.10.0
libtpu: 0.0.40
codegen_flags: <defaults>
</compile_context>

<pallas_src>
import functools
import math

import jax
import jax.numpy as jnp
from jax.experimental import pallas as pl
from jax.experimental.pallas import tpu as pltpu

F32 = jnp.float32
BF16 = jnp.bfloat16

# channel tables (fixed in the reference implementation)
UNET_CH = {4: 256, 8: 256, 16: 256, 32: 256, 64: 128, 128: 64, 256: 32, 512: 16, 1024: 8}
DEC_CH = {4: 512, 8: 512, 16: 512, 32: 512, 64: 256, 128: 128, 256: 64, 512: 32, 1024: 16}


# ---------------------------------------------------------------------------
# Generation-aware VMEM budgets
# ---------------------------------------------------------------------------
@functools.lru_cache(maxsize=None)
def _vmem_capacity():
    try:
        return int(pltpu.get_tpu_info().vmem_capacity_bytes)
    except Exception:
        return 64 * 1024 * 1024          # conservative (v7x per-TC) fallback


def _vmem_limit():
    return min(int(0.70 * _vmem_capacity()), 112 * 1024 * 1024)


def _tile_budget():
    return _vmem_capacity() // 5


def _ru(v, m):
    return -(-v // m) * m


# ---------------------------------------------------------------------------
# Generic fused conv kernel (1x1 / 3x3, plain or style-modulated)
# ---------------------------------------------------------------------------
def _make_conv_kernel(k, th, wdt, cin, cout, has_halo, has_in_scale,
                      has_out_scale, has_noise, has_add, act, slope):
    pad = k // 2

    def kernel(*refs):
        it = iter(refs)
        x_ref = next(it)                              # (th, W, Cin) f32
        halo_ref = next(it) if has_halo else None     # (2, W, Cin)
        w_ref = next(it)                              # (k*k*Cin, Cout) bf16
        b_ref = next(it)                              # (1, Cout) f32
        in_s_ref = next(it) if has_in_scale else None     # (1, Cin)
        out_s_ref = next(it) if has_out_scale else None   # (1, Cout)
        noise_ref = next(it) if has_noise else None       # (th, W, 1)
        add_ref = next(it) if has_add else None            # (th, W, Cout)
        o_ref = next(it)                                    # (th, W, Cout)

        def prep(v):
            # style modulation (f32) then cast to bf16 immediately -> all
            # downstream im2col temporaries live in bf16.
            v = v.astype(F32)
            if in_s_ref is not None:
                v = v * in_s_ref[...].reshape(1, 1, cin)
            return v.astype(BF16)

        xb = prep(x_ref[...])                         # (th, W, Cin) bf16

        if k == 1:
            acc = jnp.dot(xb.reshape(th * wdt, cin), w_ref[...],
                          preferred_element_type=F32)
        else:
            if has_halo:
                hb = prep(halo_ref[...])              # (2, W, Cin)
                xcat = jnp.concatenate([hb[0:1], xb, hb[1:2]], axis=0)
            else:
                zr = jnp.zeros((pad, wdt, cin), BF16)
                xcat = jnp.concatenate([zr, xb, zr], axis=0)
            zc = jnp.zeros((th + 2 * pad, pad, cin), BF16)
            xp = jnp.concatenate([zc, xcat, zc], axis=1)   # (th+2p, W+2p, Cin)

            acc = None
            for kh in range(k):
                for kw in range(k):
                    tap = xp[kh:kh + th, kw:kw + wdt, :].reshape(th * wdt, cin)
                    tidx = kh * k + kw
                    ws = w_ref[tidx * cin:(tidx + 1) * cin, :]
                    part = jnp.dot(tap, ws, preferred_element_type=F32)
                    acc = part if acc is None else acc + part

        if out_s_ref is not None:                     # demodulation (+sqrt2 gain)
            acc = acc * out_s_ref[...].reshape(1, cout)

        y = acc.reshape(th, wdt, cout)
        if noise_ref is not None:
            y = y + noise_ref[...]
        y = y + b_ref[...].reshape(1, 1, cout)
        if add_ref is not None:
            y = y + add_ref[...].astype(F32)

        if act == 'leaky':
            y = jnp.where(y >= 0, y, y * slope)
        elif act == 'sigmoid':
            y = jax.nn.sigmoid(y)
        o_ref[...] = y.astype(o_ref.dtype)

    return kernel


def _conv_tile_bytes(th, w, cin, cout, k, has_noise, has_add):
    """Per-grid-step VMEM working-set estimate (lane padding included)."""
    pad = k // 2
    cin_l, cout_l = _ru(cin, 128), _ru(cout, 128)
    w8, wp8 = _ru(w, 8), _ru(w + 2 * pad, 8)
    n = 2 * th * w8 * cin_l * 4                       # x tile (f32, double buffer)
    if k > 1:
        n += 2 * 2 * w8 * cin_l * 4                   # halo rows (double buffer)
        n += (th + 2 * pad) * wp8 * cin_l * 2         # padded bf16 working copy
        n += 2 * th * w8 * cin_l * 2                  # live bf16 tap temporaries
    else:
        n += th * w8 * cin_l * 2                      # bf16 copy
    n += _ru(k * k * cin, 8) * cout_l * 2             # resident bf16 weight
    n += th * w8 * cout_l * 4                         # f32 accumulator
    n += 2 * th * w8 * cout_l * 4                     # output (double buffer)
    if has_noise:
        n += 2 * th * w8 * 128 * 4
    if has_add:
        n += 2 * th * w8 * cout_l * 4
    return n


def _pick_tile_h(h, w, cin, cout, k, has_noise, has_add):
    th = h
    budget = _tile_budget()
    while th > 8 and th % 2 == 0 and _conv_tile_bytes(
            th, w, cin, cout, k, has_noise, has_add) > budget:
        th //= 2
    return th


def _build_halo(x, th, nt):
    """(B,H,W,C) -> (B,nt,2,W,C): the row above / below every row tile
    (zeros at the image boundary).  Only 2*nt rows of HBM traffic."""
    b, h, w, c = x.shape
    zero = jnp.zeros((b, 1, w, c), x.dtype)
    parts = []
    for t in range(nt):
        top = x[:, t * th - 1:t * th] if t > 0 else zero
        bot = x[:, t * th + th:t * th + th + 1] if t < nt - 1 else zero
        parts.append(jnp.concatenate([top, bot], axis=1))      # (B,2,W,C)
    return jnp.stack(parts, axis=1)                             # (B,nt,2,W,C)


def conv2d(x, p, *, in_scale=None, out_scale=None, noise=None, add=None,
           act='none', slope=0.2, tile_h=None):
    """'same' conv, stride 1, NHWC, fused epilogue.

    x: (B,H,W,Cin);  p['w']: (k,k,Cin,Cout) bf16;  p['b']: (1,Cout) f32.
    in_scale  (B,Cin):  style modulation  (conv(x, w*s) == conv(x*s, w)).
    out_scale (B,Cout): demodulation (+ folded gain) on output channels.
    noise (1,H,W,1): pre-scaled noise added before bias.
    add   (B,H,W,Cout): fused residual / skip add.
    act: 'none' | 'leaky' | 'sigmoid'.
    """
    bsz, h, wdt, cin = x.shape
    w = p['w']
    k = w.shape[0]
    cout = w.shape[-1]
    assert w.shape == (k, k, cin, cout), (w.shape, x.shape)

    th = tile_h if tile_h is not None else _pick_tile_h(
        h, wdt, cin, cout, k, noise is not None, add is not None)
    assert h % th == 0, (h, th)
    nt = h // th
    has_halo = (k > 1 and nt > 1)

    w2d = w.reshape(k * k * cin, cout)                # free reshape of bf16 weight
    b2 = p['b']

    inputs = [x]
    in_specs = [pl.BlockSpec((None, th, wdt, cin), lambda ti, bi: (bi, ti, 0, 0))]
    if has_halo:
        inputs.append(_build_halo(x, th, nt))
        in_specs.append(pl.BlockSpec((None, None, 2, wdt, cin),
                                     lambda ti, bi: (bi, ti, 0, 0, 0)))
    inputs += [w2d, b2]
    in_specs += [pl.BlockSpec((k * k * cin, cout), lambda ti, bi: (0, 0)),
                 pl.BlockSpec((1, cout), lambda ti, bi: (0, 0))]
    if in_scale is not None:
        inputs.append(in_scale.reshape(bsz, 1, cin).astype(F32))
        in_specs.append(pl.BlockSpec((None, 1, cin), lambda ti, bi: (bi, 0, 0)))
    if out_scale is not None:
        inputs.append(out_scale.reshape(bsz, 1, cout).astype(F32))
        in_specs.append(pl.BlockSpec((None, 1, cout), lambda ti, bi: (bi, 0, 0)))
    if noise is not None:
        inputs.append(noise.astype(F32))
        in_specs.append(pl.BlockSpec((None, th, wdt, 1), lambda ti, bi: (0, ti, 0, 0)))
    if add is not None:
        inputs.append(add)
        in_specs.append(pl.BlockSpec((None, th, wdt, cout), lambda ti, bi: (bi, ti, 0, 0)))

    kern = _make_conv_kernel(k, th, wdt, cin, cout, has_halo,
                             in_scale is not None, out_scale is not None,
                             noise is not None, add is not None, act, slope)
    return pl.pallas_call(
        kern,
        out_shape=jax.ShapeDtypeStruct((bsz, h, wdt, cout), x.dtype),
        grid=(nt, bsz),
        in_specs=in_specs,
        out_specs=pl.BlockSpec((None, th, wdt, cout), lambda ti, bi: (bi, ti, 0, 0)),
        compiler_params=pltpu.CompilerParams(
            dimension_semantics=("parallel", "parallel"),
            vmem_limit_bytes=_vmem_limit()),
    )(*inputs)


# ---------------------------------------------------------------------------
# Linear kernel and fused style pipeline (norm + MLP + all modulation projections)
# ---------------------------------------------------------------------------
def _linear_kernel(x_ref, w_ref, b_ref, o_ref):
    y = jnp.dot(x_ref[...].astype(BF16), w_ref[...],
                preferred_element_type=F32) + b_ref[...]
    o_ref[...] = y.astype(o_ref.dtype)


def linear(x, p):
    """x: (B,Din) f32; p['w']: (Din,Dout) bf16; p['b']: (1,Dout) f32."""
    bsz, din = x.shape
    dout = p['w'].shape[1]
    return pl.pallas_call(
        _linear_kernel,
        out_shape=jax.ShapeDtypeStruct((bsz, dout), F32),
        grid=(1,),
        in_specs=[pl.BlockSpec((bsz, din), lambda i: (0, 0)),
                  pl.BlockSpec((din, dout), lambda i: (0, 0)),
                  pl.BlockSpec((1, dout), lambda i: (0, 0))],
        out_specs=pl.BlockSpec((bsz, dout), lambda i: (0, 0)),
        compiler_params=pltpu.CompilerParams(vmem_limit_bytes=_vmem_limit()),
    )(x, p['w'], p['b'])


def _style_kernel(x_ref, w_ref, b_ref, wm_ref, bm_ref, o_ref, *, nlayers, slope):
    s = x_ref[...].astype(F32)
    # NormStyleCode
    s = s * jax.lax.rsqrt(jnp.mean(s * s, axis=1, keepdims=True) + 1e-8)
    for l in range(nlayers):
        y = jnp.dot(s.astype(BF16), w_ref[l], preferred_element_type=F32) + b_ref[l]
        s = jnp.where(y >= 0, y, y * slope)
    # concatenated modulation projections for every StyleConv / ToRGB
    m = jnp.dot(s.astype(BF16), wm_ref[...], preferred_element_type=F32) + bm_ref[...]
    o_ref[...] = m.astype(o_ref.dtype)


def style_mods(style, p, *, slope=0.2):
    """NormStyleCode + num_mlp x (Linear+LeakyReLU) + all modulation Linears,
    fused into a single kernel.  Returns (B, total_cin)."""
    bsz, nsf = style.shape
    nl = p['mlp_w'].shape[0]
    total = p['mod_w'].shape[1]
    return pl.pallas_call(
        functools.partial(_style_kernel, nlayers=nl, slope=slope),
        out_shape=jax.ShapeDtypeStruct((bsz, total), F32),
        grid=(1,),
        in_specs=[pl.BlockSpec((bsz, nsf), lambda i: (0, 0)),
                  pl.BlockSpec((nl, nsf, nsf), lambda i: (0, 0, 0)),
                  pl.BlockSpec((nl, 1, nsf), lambda i: (0, 0, 0)),
                  pl.BlockSpec((nsf, total), lambda i: (0, 0)),
                  pl.BlockSpec((1, total), lambda i: (0, 0))],
        out_specs=pl.BlockSpec((bsz, total), lambda i: (0, 0)),
        compiler_params=pltpu.CompilerParams(vmem_limit_bytes=_vmem_limit()),
    )(style, p['mlp_w'], p['mlp_b'], p['mod_w'], p['mod_b'])


# ---------------------------------------------------------------------------
# JAX glue (exact PyTorch semantics)
# ---------------------------------------------------------------------------
def bilinear_resize(x, out_h, out_w):
    """Matches torch F.interpolate(mode='bilinear', align_corners=False)."""
    _, h, w, _ = x.shape
    if out_h == h and out_w == w:
        return x

    def idx(in_size, out_size):
        scale = in_size / out_size
        src = jnp.maximum((jnp.arange(out_size, dtype=F32) + 0.5) * scale - 0.5, 0.0)
        i0 = jnp.minimum(jnp.floor(src).astype(jnp.int32), in_size - 1)
        i1 = jnp.minimum(i0 + 1, in_size - 1)
        frac = src - i0.astype(F32)
        return i0, i1, frac

    i0, i1, fh = idx(h, out_h)
    j0, j1, fw = idx(w, out_w)
    fh = fh[None, :, None, None]
    fw = fw[None, None, :, None]
    xr = jnp.take(x, i0, axis=1) * (1.0 - fh) + jnp.take(x, i1, axis=1) * fh
    return jnp.take(xr, j0, axis=2) * (1.0 - fw) + jnp.take(xr, j1, axis=2) * fw


def res_block(x, p, mode):
    _, h, w, _ = x.shape
    nh, nw = (h // 2, w // 2) if mode == 'down' else (h * 2, w * 2)
    out = conv2d(x, p['conv1'], act='leaky')
    out = bilinear_resize(out, nh, nw)
    out = conv2d(out, p['conv2'], act='leaky')
    xs = bilinear_resize(x, nh, nw)
    # skip conv (no bias) with the residual add fused into its epilogue
    return conv2d(xs, p['skip'], add=out, act='none')


def style_conv(x, s_mod, noise, p, *, sample_mode):
    # out = modconv(x)*sqrt(2) + noise_w*noise + bias; LeakyReLU (all fused).
    # demod = rsqrt(sum_{k,k,cin}(w*s)^2 + eps); sqrt(2) folded into it.
    demod = jax.lax.rsqrt(jnp.dot(s_mod * s_mod, p['w2sum']) + 1e-8)   # (B,Cout)
    out_scale = demod * math.sqrt(2.0)
    if sample_mode == 'upsample':
        x = bilinear_resize(x, x.shape[1] * 2, x.shape[2] * 2)
    elif sample_mode == 'downsample':
        x = bilinear_resize(x, x.shape[1] // 2, x.shape[2] // 2)
    noise_scaled = p['noise_w'] * noise
    return conv2d(x, p, in_scale=s_mod, out_scale=out_scale,
                  noise=noise_scaled, act='leaky')


def to_rgb(x, s_mod, p, skip=None, *, upsample=True, final_act=False):
    add = None
    if skip is not None:
        if upsample:
            skip = bilinear_resize(skip, x.shape[1], x.shape[2])
        add = skip
    return conv2d(x, p, in_scale=s_mod, add=add,
                  act='sigmoid' if final_act else 'none')


def _decoder_mod_layout(out_size):
    """Order and Cin of every modulated conv (must match _decoder_init)."""
    log_size = int(math.log2(out_size))
    cins = [DEC_CH[4], DEC_CH[4]]                      # conv1, to_rgb1
    cin = DEC_CH[4]
    for i in range(3, log_size + 1):
        cout = DEC_CH[2 ** i]
        cins += [cin, cout, cout]                      # conv_a, conv_b, to_rgb
        cin = cout
    offs = [0]
    for c in cins:
        offs.append(offs[-1] + c)
    return cins, offs


def stylegan_decoder(style_code, conditions, p, *, out_size, final_sigmoid):
    _, offs = _decoder_mod_layout(out_size)
    mods = style_mods(style_code, p)                   # (B, total_cin)

    def mod(j):
        return mods[:, offs[j]:offs[j + 1]]

    bsz = style_code.shape[0]
    out = jnp.tile(p['const'], (bsz, 1, 1, 1))
    out = style_conv(out, mod(0), p['noises'][0], p['conv1'], sample_mode=None)
    n_rgb = len(p['to_rgbs'])
    skip = to_rgb(out, mod(1), p['to_rgb1'], None, upsample=False,
                  final_act=(final_sigmoid and n_rgb == 0))
    i = 1
    for li in range(n_rgb):
        out = style_conv(out, mod(2 + 3 * li), p['noises'][2 * li + 1],
                         p['convs'][2 * li], sample_mode='upsample')
        if i < len(conditions):
            out = out * conditions[i - 1] + conditions[i]          # FiLM
        out = style_conv(out, mod(3 + 3 * li), p['noises'][2 * li + 2],
                         p['convs'][2 * li + 1], sample_mode=None)
        skip = to_rgb(out, mod(4 + 3 * li), p['to_rgbs'][li], skip, upsample=True,
                      final_act=(final_sigmoid and li == n_rgb - 1))
        i += 2
    return skip


def style_unet_forward(params, x_nchw, *, out_size, activation=True):
    x = jnp.transpose(x_nchw, (0, 2, 3, 1)).astype(F32)    # NCHW -> NHWC
    bsz = x.shape[0]
    log_size = int(math.log2(out_size))
    if x.shape[1] < out_size:
        x = bilinear_resize(x, out_size, out_size)
    # in_size <= out_size branch (the only variant built here)
    feat = conv2d(x, params['first'], act='leaky')
    unet_skips = []
    for i in range(log_size - 2):
        feat = res_block(feat, params['down'][i], 'down')
        unet_skips.insert(0, feat)
    feat = conv2d(feat, params['final_conv'], act='leaky')
    # torch flattens in NCHW order
    flat = jnp.transpose(feat, (0, 3, 1, 2)).reshape(bsz, -1)
    style_code = linear(flat, params['final_linear'])
    conditions = []
    for i in range(log_size - 2):
        feat = feat + unet_skips[i]
        feat = res_block(feat, params['up'][i], 'up')
        cs = params['cond_scale'][i]
        conditions.append(conv2d(conv2d(feat, cs['c1'], act='leaky'), cs['c2']))
        ct = params['cond_shift'][i]
        conditions.append(conv2d(conv2d(feat, ct['c1'], act='leaky'), ct['c2']))
    # final sigmoid fused into the last ToRGB conv epilogue
    image = stylegan_decoder(style_code, conditions, params['decoder'],
                             out_size=out_size, final_sigmoid=activation)
    return jnp.transpose(image, (0, 3, 1, 2))               # NHWC -> NCHW


# ---------------------------------------------------------------------------
# Deterministic parameter initialization (synthetic; shapes follow __init__)
# Weights are stored pre-reshaped / pre-cast to bf16 where the kernels use them.
# ---------------------------------------------------------------------------
def _keys(key):
    while True:
        key, sub = jax.random.split(key)
        yield sub


def _conv_init(kg, k, cin, cout, bias=True):
    std = 1.0 / math.sqrt(cin * k * k)
    w = jax.random.normal(next(kg), (k, k, cin, cout), F32) * std
    b = jnp.zeros((1, cout), F32)                      # zeros also used when bias=False
    return {'w': w.astype(BF16), 'b': b}


def _resblock_init(kg, cin, cout):
    return {'conv1': _conv_init(kg, 3, cin, cin),
            'conv2': _conv_init(kg, 3, cin, cout),
            'skip': _conv_init(kg, 1, cin, cout, bias=False)}


def _decoder_init(kg, out_size, out_dim, nsf, num_mlp):
    log_size = int(math.log2(out_size))
    num_layers = (log_size - 2) * 2 + 1
    assert num_mlp >= 1

    mod_ws, mod_bs = [], []

    def modconv(k, cin, cout):
        w = jax.random.normal(next(kg), (k, k, cin, cout), F32) / math.sqrt(cin * k * k)
        mod_ws.append(jax.random.normal(next(kg), (nsf, cin), F32) / math.sqrt(nsf))
        mod_bs.append(jnp.ones((cin,), F32))           # bias_fill=1 as in reference
        return {'w': w.astype(BF16), 'w2sum': jnp.sum(w * w, axis=(0, 1))}

    def styleconv(cin, cout):
        q = modconv(3, cin, cout)
        q['noise_w'] = jnp.zeros((), F32)
        q['b'] = jnp.zeros((1, cout), F32)
        return q

    def torgb(cin):
        q = modconv(1, cin, out_dim)
        q.pop('w2sum')                                  # ToRGB does not demodulate
        q['b'] = jnp.zeros((1, out_dim), F32)
        return q

    p = {'const': jax.random.normal(next(kg), (1, 4, 4, DEC_CH[4]), F32)}
    # NOTE: construction order must match _decoder_mod_layout.
    p['conv1'] = styleconv(DEC_CH[4], DEC_CH[4])
    p['to_rgb1'] = torgb(DEC_CH[4])
    p['convs'], p['to_rgbs'] = [], []
    cin = DEC_CH[4]
    for i in range(3, log_size + 1):
        cout = DEC_CH[2 ** i]
        p['convs'].append(styleconv(cin, cout))
        p['convs'].append(styleconv(cout, cout))
        p['to_rgbs'].append(torgb(cout))
        cin = cout

    p['mlp_w'] = jnp.stack([jax.random.normal(next(kg), (nsf, nsf), F32) / math.sqrt(nsf)
                            for _ in range(num_mlp)]).astype(BF16)
    p['mlp_b'] = jnp.zeros((num_mlp, 1, nsf), F32)
    p['mod_w'] = jnp.concatenate(mod_ws, axis=1).astype(BF16)        # (nsf, total)
    p['mod_b'] = jnp.concatenate(mod_bs)[None, :]                    # (1, total)
    p['noises'] = [jax.random.normal(next(kg),
                                     (1, 2 ** ((li + 5) // 2), 2 ** ((li + 5) // 2), 1), F32)
                   for li in range(num_layers)]
    return p


def init_style_unet(key, *, in_size, out_size, in_dim, out_dim, num_style_feat, num_mlp):
    assert in_size <= out_size, "only the in_size <= out_size variant is built here"
    kg = _keys(key)
    log_size = int(math.log2(out_size))
    p = {'first': _conv_init(kg, 1, in_dim, UNET_CH[out_size]), 'down': []}
    cin = UNET_CH[out_size]
    for i in range(log_size, 2, -1):
        cout = UNET_CH[2 ** (i - 1)]
        p['down'].append(_resblock_init(kg, cin, cout))
        cin = cout
    p['final_conv'] = _conv_init(kg, 3, cin, UNET_CH[4])
    cin = UNET_CH[4]
    din = UNET_CH[4] * 16
    p['final_linear'] = {'w': (jax.random.normal(next(kg), (din, num_style_feat), F32)
                               / math.sqrt(din)).astype(BF16),
                         'b': jnp.zeros((1, num_style_feat), F32)}
    p['up'], p['cond_scale'], p['cond_shift'] = [], [], []
    for i in range(3, log_size + 1):
        cout = UNET_CH[2 ** i]
        p['up'].append(_resblock_init(kg, cin, cout))
        cin = cout
        ch = UNET_CH[2 ** i]
        p['cond_scale'].append({'c1': _conv_init(kg, 3, ch, ch),
                                'c2': _conv_init(kg, 3, ch, ch * 2)})
        p['cond_shift'].append({'c1': _conv_init(kg, 3, ch, ch),
                                'c2': _conv_init(kg, 3, ch, ch * 2)})
    # note: StyleUNet.toRGB is constructed in __init__ but never used in forward(); omitted.
    p['decoder'] = _decoder_init(kg, out_size, out_dim, num_style_feat, num_mlp)
    return p


# ---------------------------------------------------------------------------
if __name__ == "__main__":
    key = jax.random.PRNGKey(0)

    # --- self-test of the tiled/halo 3x3 conv path against an XLA reference ---
    tk0, tk1, tk2, key = jax.random.split(key, 4)
    xt = jax.random.normal(tk0, (1, 32, 32, 16), F32)
    wt = jax.random.normal(tk1, (3, 3, 16, 32), F32) / math.sqrt(16 * 9)
    bt = jax.random.normal(tk2, (32,), F32) * 0.1
    pt = {'w': wt.astype(BF16), 'b': bt.reshape(1, 32)}
    got = conv2d(xt, pt, act='none', tile_h=8)          # forces nt=4 -> halo path
    ref = jax.lax.conv_general_dilated(
        xt, wt.astype(BF16).astype(F32), (1, 1), 'SAME',
        dimension_numbers=('NHWC', 'HWIO', 'NHWC'),
        precision=jax.lax.Precision.HIGHEST) + bt
    jax.block_until_ready(got)
    assert got.shape == ref.shape
    assert float(jnp.max(jnp.abs(got - ref))) < 5e-2

    # --- full StyleUNet forward at a small configuration ---
    cfg = dict(in_size=16, out_size=16, in_dim=3, out_dim=3,
               num_style_feat=64, num_mlp=2)
    pkey, xkey = jax.random.split(key)
    params = init_style_unet(pkey, **cfg)
    x = jax.random.normal(xkey, (2, cfg['in_dim'], cfg['in_size'], cfg['in_size']),
                          dtype=F32)

    fwd = jax.jit(functools.partial(style_unet_forward,
                                    out_size=cfg['out_size'], activation=True))
    out = fwd(params, x)
    jax.block_until_ready(out)

    assert out.shape == (2, cfg['out_dim'], cfg['out_size'], cfg['out_size']), out.shape
    assert bool(jnp.isfinite(out).all())
    print("KERNEL_OK")
</pallas_src>

<mosaic_0001>
module attributes {stable_mosaic.version = 11 : i64} {
  func.func @kernel(%arg0: i32, %arg1: i32, %arg2: memref<1x8x32x16xf32, #tpu.memory_space<vmem>>, %arg3: memref<1x1x2x32x16xf32, #tpu.memory_space<vmem>>, %arg4: memref<144x32xbf16, #tpu.memory_space<vmem>>, %arg5: memref<1x32xf32, #tpu.memory_space<vmem>>, %arg6: memref<1x8x32x32xf32, #tpu.memory_space<vmem>>) attributes {dimension_semantics = [#tpu.dimension_semantics<parallel>, #tpu.dimension_semantics<parallel>], iteration_bounds = array<i64: 4, 1>, scalar_prefetch = 0 : i64, scratch_operands = 0 : i64, tpu.core_type = #tpu.core_type<tc>, window_params = [{transform_indices = @transform_0, window_bounds = array<i64: 1, 8, 32, 16>}, {transform_indices = @transform_1, window_bounds = array<i64: 1, 1, 2, 32, 16>}, {pipeline_mode = #tpu.pipeline_mode<synchronous>, transform_indices = @transform_2, window_bounds = array<i64: 144, 32>}, {pipeline_mode = #tpu.pipeline_mode<synchronous>, transform_indices = @transform_3, window_bounds = array<i64: 1, 32>}, {transform_indices = @transform_4, window_bounds = array<i64: 1, 8, 32, 32>}]} {
    %c0 = arith.constant 0 : index
    %c0_0 = arith.constant 0 : index
    %c0_1 = arith.constant 0 : index
    %c0_2 = arith.constant 0 : index
    %0 = vector.load %arg2[%c0, %c0_0, %c0_1, %c0_2] : memref<1x8x32x16xf32, #tpu.memory_space<vmem>>, vector<1x8x32x16xf32>
    %1 = vector.shape_cast %0 : vector<1x8x32x16xf32> to vector<8x32x16xf32>
    %2 = arith.truncf %1 : vector<8x32x16xf32> to vector<8x32x16xbf16>
    %c0_3 = arith.constant 0 : index
    %c0_4 = arith.constant 0 : index
    %c0_5 = arith.constant 0 : index
    %c0_6 = arith.constant 0 : index
    %c0_7 = arith.constant 0 : index
    %3 = vector.load %arg3[%c0_3, %c0_4, %c0_5, %c0_6, %c0_7] : memref<1x1x2x32x16xf32, #tpu.memory_space<vmem>>, vector<1x1x2x32x16xf32>
    %4 = vector.shape_cast %3 : vector<1x1x2x32x16xf32> to vector<2x32x16xf32>
    %5 = arith.truncf %4 : vector<2x32x16xf32> to vector<2x32x16xbf16>
    %6 = vector.extract_strided_slice %5 {offsets = [0, 0, 0], sizes = [1, 32, 16], strides = [1, 1, 1]} : vector<2x32x16xbf16> to vector<1x32x16xbf16>
    %7 = vector.extract_strided_slice %5 {offsets = [1, 0, 0], sizes = [1, 32, 16], strides = [1, 1, 1]} : vector<2x32x16xbf16> to vector<1x32x16xbf16>
    %8 = tpu.concatenate %6, %2, %7 in 0 : vector<1x32x16xbf16>, vector<8x32x16xbf16>, vector<1x32x16xbf16> -> vector<10x32x16xbf16>
    %cst = arith.constant 0.000000e+00 : bf16
    %9 = vector.broadcast %cst : bf16 to vector<10x1x16xbf16>
    %10 = tpu.concatenate %9, %8, %9 in 1 : vector<10x1x16xbf16>, vector<10x32x16xbf16>, vector<10x1x16xbf16> -> vector<10x34x16xbf16>
    %11 = vector.extract_strided_slice %10 {offsets = [0, 0, 0], sizes = [8, 32, 16], strides = [1, 1, 1]} : vector<10x34x16xbf16> to vector<8x32x16xbf16>
    %12 = vector.shape_cast %11 : vector<8x32x16xbf16> to vector<256x16xbf16>
    %c0_8 = arith.constant 0 : index
    %c0_9 = arith.constant 0 : index
    %13 = vector.load %arg4[%c0_8, %c0_9] : memref<144x32xbf16, #tpu.memory_space<vmem>>, vector<16x32xbf16>
    %cst_10 = arith.constant dense<0.000000e+00> : vector<256x32xf32>
    %14 = tpu.matmul %12, %13, %cst_10 {dimension_numbers = #tpu.dot_dimension_numbers<[1], [0], [0], [1], [0, 0, 1, 1], [], []>} : vector<256x16xbf16>, vector<16x32xbf16>, vector<256x32xf32> -> vector<256x32xf32>
    %15 = vector.extract_strided_slice %10 {offsets = [0, 1, 0], sizes = [8, 32, 16], strides = [1, 1, 1]} : vector<10x34x16xbf16> to vector<8x32x16xbf16>
    %16 = vector.shape_cast %15 : vector<8x32x16xbf16> to vector<256x16xbf16>
    %c16 = arith.constant 16 : index
    %c0_11 = arith.constant 0 : index
    %17 = vector.load %arg4[%c16, %c0_11] : memref<144x32xbf16, #tpu.memory_space<vmem>>, vector<16x32xbf16>
    %cst_12 = arith.constant dense<0.000000e+00> : vector<256x32xf32>
    %18 = tpu.matmul %16, %17, %cst_12 {dimension_numbers = #tpu.dot_dimension_numbers<[1], [0], [0], [1], [0, 0, 1, 1], [], []>} : vector<256x16xbf16>, vector<16x32xbf16>, vector<256x32xf32> -> vector<256x32xf32>
    %19 = arith.addf %14, %18 : vector<256x32xf32>
    %20 = vector.extract_strided_slice %10 {offsets = [0, 2, 0], sizes = [8, 32, 16], strides = [1, 1, 1]} : vector<10x34x16xbf16> to vector<8x32x16xbf16>
    %21 = vector.shape_cast %20 : vector<8x32x16xbf16> to vector<256x16xbf16>
    %c32 = arith.constant 32 : index
    %c0_13 = arith.constant 0 : index
    %22 = vector.load %arg4[%c32, %c0_13] : memref<144x32xbf16, #tpu.memory_space<vmem>>, vector<16x32xbf16>
    %cst_14 = arith.constant dense<0.000000e+00> : vector<256x32xf32>
    %23 = tpu.matmul %21, %22, %cst_14 {dimension_numbers = #tpu.dot_dimension_numbers<[1], [0], [0], [1], [0, 0, 1, 1], [], []>} : vector<256x16xbf16>, vector<16x32xbf16>, vector<256x32xf32> -> vector<256x32xf32>
    %24 = arith.addf %19, %23 : vector<256x32xf32>
    %25 = vector.extract_strided_slice %10 {offsets = [1, 0, 0], sizes = [8, 32, 16], strides = [1, 1, 1]} : vector<10x34x16xbf16> to vector<8x32x16xbf16>
    %26 = vector.shape_cast %25 : vector<8x32x16xbf16> to vector<256x16xbf16>
    %c48 = arith.constant 48 : index
    %c0_15 = arith.constant 0 : index
    %27 = vector.load %arg4[%c48, %c0_15] : memref<144x32xbf16, #tpu.memory_space<vmem>>, vector<16x32xbf16>
    %cst_16 = arith.constant dense<0.000000e+00> : vector<256x32xf32>
    %28 = tpu.matmul %26, %27, %cst_16 {dimension_numbers = #tpu.dot_dimension_numbers<[1], [0], [0], [1], [0, 0, 1, 1], [], []>} : vector<256x16xbf16>, vector<16x32xbf16>, vector<256x32xf32> -> vector<256x32xf32>
    %29 = arith.addf %24, %28 : vector<256x32xf32>
    %30 = vector.extract_strided_slice %10 {offsets = [1, 1, 0], sizes = [8, 32, 16], strides = [1, 1, 1]} : vector<10x34x16xbf16> to vector<8x32x16xbf16>
    %31 = vector.shape_cast %30 : vector<8x32x16xbf16> to vector<256x16xbf16>
    %c64 = arith.constant 64 : index
    %c0_17 = arith.constant 0 : index
    %32 = vector.load %arg4[%c64, %c0_17] : memref<144x32xbf16, #tpu.memory_space<vmem>>, vector<16x32xbf16>
    %cst_18 = arith.constant dense<0.000000e+00> : vector<256x32xf32>
    %33 = tpu.matmul %31, %32, %cst_18 {dimension_numbers = #tpu.dot_dimension_numbers<[1], [0], [0], [1], [0, 0, 1, 1], [], []>} : vector<256x16xbf16>, vector<16x32xbf16>, vector<256x32xf32> -> vector<256x32xf32>
    %34 = arith.addf %29, %33 : vector<256x32xf32>
    %35 = vector.extract_strided_slice %10 {offsets = [1, 2, 0], sizes = [8, 32, 16], strides = [1, 1, 1]} : vector<10x34x16xbf16> to vector<8x32x16xbf16>
    %36 = vector.shape_cast %35 : vector<8x32x16xbf16> to vector<256x16xbf16>
    %c80 = arith.constant 80 : index
    %c0_19 = arith.constant 0 : index
    %37 = vector.load %arg4[%c80, %c0_19] : memref<144x32xbf16, #tpu.memory_space<vmem>>, vector<16x32xbf16>
    %cst_20 = arith.constant dense<0.000000e+00> : vector<256x32xf32>
    %38 = tpu.matmul %36, %37, %cst_20 {dimension_numbers = #tpu.dot_dimension_numbers<[1], [0], [0], [1], [0, 0, 1, 1], [], []>} : vector<256x16xbf16>, vector<16x32xbf16>, vector<256x32xf32> -> vector<256x32xf32>
    %39 = arith.addf %34, %38 : vector<256x32xf32>
    %40 = vector.extract_strided_slice %10 {offsets = [2, 0, 0], sizes = [8, 32, 16], strides = [1, 1, 1]} : vector<10x34x16xbf16> to vector<8x32x16xbf16>
    %41 = vector.shape_cast %40 : vector<8x32x16xbf16> to vector<256x16xbf16>
    %c96 = arith.constant 96 : index
    %c0_21 = arith.constant 0 : index
    %42 = vector.load %arg4[%c96, %c0_21] : memref<144x32xbf16, #tpu.memory_space<vmem>>, vector<16x32xbf16>
    %cst_22 = arith.constant dense<0.000000e+00> : vector<256x32xf32>
    %43 = tpu.matmul %41, %42, %cst_22 {dimension_numbers = #tpu.dot_dimension_numbers<[1], [0], [0], [1], [0, 0, 1, 1], [], []>} : vector<256x16xbf16>, vector<16x32xbf16>, vector<256x32xf32> -> vector<256x32xf32>
    %44 = arith.addf %39, %43 : vector<256x32xf32>
    %45 = vector.extract_strided_slice %10 {offsets = [2, 1, 0], sizes = [8, 32, 16], strides = [1, 1, 1]} : vector<10x34x16xbf16> to vector<8x32x16xbf16>
    %46 = vector.shape_cast %45 : vector<8x32x16xbf16> to vector<256x16xbf16>
    %c112 = arith.constant 112 : index
    %c0_23 = arith.constant 0 : index
    %47 = vector.load %arg4[%c112, %c0_23] : memref<144x32xbf16, #tpu.memory_space<vmem>>, vector<16x32xbf16>
    %cst_24 = arith.constant dense<0.000000e+00> : vector<256x32xf32>
    %48 = tpu.matmul %46, %47, %cst_24 {dimension_numbers = #tpu.dot_dimension_numbers<[1], [0], [0], [1], [0, 0, 1, 1], [], []>} : vector<256x16xbf16>, vector<16x32xbf16>, vector<256x32xf32> -> vector<256x32xf32>
    %49 = arith.addf %44, %48 : vector<256x32xf32>
    %50 = vector.extract_strided_slice %10 {offsets = [2, 2, 0], sizes = [8, 32, 16], strides = [1, 1, 1]} : vector<10x34x16xbf16> to vector<8x32x16xbf16>
    %51 = vector.shape_cast %50 : vector<8x32x16xbf16> to vector<256x16xbf16>
    %c128 = arith.constant 128 : index
    %c0_25 = arith.constant 0 : index
    %52 = vector.load %arg4[%c128, %c0_25] : memref<144x32xbf16, #tpu.memory_space<vmem>>, vector<16x32xbf16>
    %cst_26 = arith.constant dense<0.000000e+00> : vector<256x32xf32>
    %53 = tpu.matmul %51, %52, %cst_26 {dimension_numbers = #tpu.dot_dimension_numbers<[1], [0], [0], [1], [0, 0, 1, 1], [], []>} : vector<256x16xbf16>, vector<16x32xbf16>, vector<256x32xf32> -> vector<256x32xf32>
    %54 = arith.addf %49, %53 : vector<256x32xf32>
    %55 = vector.shape_cast %54 : vector<256x32xf32> to vector<8x32x32xf32>
    %c0_27 = arith.constant 0 : index
    %c0_28 = arith.constant 0 : index
    %56 = vector.load %arg5[%c0_27, %c0_28] : memref<1x32xf32, #tpu.memory_space<vmem>>, vector<1x32xf32>
    %57 = vector.shape_cast %56 : vector<1x32xf32> to vector<1x1x32xf32>
    %58 = vector.broadcast %57 : vector<1x1x32xf32> to vector<8x32x32xf32>
    %59 = arith.addf %55, %58 : vector<8x32x32xf32>
    %c0_29 = arith.constant 0 : index
    %c0_30 = arith.constant 0 : index
    %c0_31 = arith.constant 0 : index
    %c0_32 = arith.constant 0 : index
    %60 = vector.load %arg6[%c0_29, %c0_30, %c0_31, %c0_32] : memref<1x8x32x32xf32, #tpu.memory_space<vmem>>, vector<1x8x32x32xf32>
    %61 = vector.shape_cast %60 : vector<1x8x32x32xf32> to vector<8x32x32xf32>
    %62 = vector.shape_cast %59 : vector<8x32x32xf32> to vector<1x8x32x32xf32>
    tpu.vector_store %arg6[%c0_29, %c0_30, %c0_31, %c0_32], %62 {strides = array<i32>} : memref<1x8x32x32xf32, #tpu.memory_space<vmem>>, vector<1x8x32x32xf32>,
    return
  }
  func.func @transform_0(%arg0: i32, %arg1: i32) -> (i32, i32, i32, i32) {
    %c0_i32 = arith.constant 0 : i32
    %c0_i32_0 = arith.constant 0 : i32
    %c0_i32_1 = arith.constant 0 : i32
    return %arg1, %arg0, %c0_i32, %c0_i32_0 : i32, i32, i32, i32
  }
  func.func @transform_1(%arg0: i32, %arg1: i32) -> (i32, i32, i32, i32, i32) {
    %c0_i32 = arith.constant 0 : i32
    %c0_i32_0 = arith.constant 0 : i32
    %c0_i32_1 = arith.constant 0 : i32
    %c0_i32_2 = arith.constant 0 : i32
    return %arg1, %arg0, %c0_i32, %c0_i32_0, %c0_i32_1 : i32, i32, i32, i32, i32
  }
  func.func @transform_2(%arg0: i32, %arg1: i32) -> (i32, i32) {
    %c0_i32 = arith.constant 0 : i32
    %c0_i32_0 = arith.constant 0 : i32
    %c0_i32_1 = arith.constant 0 : i32
    return %c0_i32, %c0_i32_0 : i32, i32
  }
  func.func @transform_3(%arg0: i32, %arg1: i32) -> (i32, i32) {
    %c0_i32 = arith.constant 0 : i32
    %c0_i32_0 = arith.constant 0 : i32
    %c0_i32_1 = arith.constant 0 : i32
    return %c0_i32, %c0_i32_0 : i32, i32
  }
  func.func @transform_4(%arg0: i32, %arg1: i32) -> (i32, i32, i32, i32) {
    %c0_i32 = arith.constant 0 : i32
    %c0_i32_0 = arith.constant 0 : i32
    %c0_i32_1 = arith.constant 0 : i32
    return %arg1, %arg0, %c0_i32, %c0_i32_0 : i32, i32, i32, i32
  }
}

</mosaic_0001>

<llo_original>
// kernel: tpu_custom_call.1
$region0: #{tpu_custom_call.1}
  #allocation0 [shape = 'u32[]', space=smem, size = 0x4, offset = 0x4, fixed_abs, tag = 'smem constant byte address 0x4 - core index']
  #allocation1 [shape = 'u32[144,128]{1,0:T(1,128)}', space=vmem, size = 0x12000, scoped, tag = 'internal scratch']
  %s0 = inlined_call_operand.vmem [shape: f32[1,32,32,16], index: 0, kind: input, shape index: {}]
  %s1 = inlined_call_operand.vmem [shape: f32[1,4,2,32,16], index: 1, kind: input, shape index: {}]
  %s2 = inlined_call_operand.vmem [shape: bf16[144,32], index: 2, kind: input, shape index: {}]
  %s3 = inlined_call_operand.vmem [shape: f32[1,32], index: 3, kind: input, shape index: {}]
  %s4 = inlined_call_operand.hbm [shape: f32[1,32,32,32], index: 4, kind: output, shape index: {}]
  %s5 = sld [smem:[#allocation0]]
  $region49: #{tpu_custom_call.1} parent=0
    _
  %s7 = ssub.s32 1, %s5
  %s8 = scalar_select 0, %s7, %s5
  $region1: #{tpu_custom_call.1} parent=0
    #allocation2 [shape = 'u8[262144]{0}', space=vmem, size = 0x40000, scoped, tag = 'output window, operand 0']
    #allocation3 [shape = 's32[2]{0}', space=sflag, size = 0x8, scoped, tag = 'scoped memory for tpu_custom_call.1']
    %9 = vsyncpa [#allocation3], 0
    %s10 = scalar_lea.sflag [#allocation3], 1
    %11 = vsyncpa %s10, 0
    loop: start=0, step=1, limit=6
    $region2: #{tpu_custom_call.1} parent=1 // loop_pre_header
      _
    $region3: #{tpu_custom_call.1} parent=1 // loop_header
      %s13 = sphi 0, %s17
      %p14 = scmp.ge.s32.totalorder %s13, 6
      %s20 = sphi 0, %s32
      %s21 = sphi 0, %s28
      %s22 = sphi 0, %s20
      %s23 = sphi 0, %s21
      %s24 = sphi 0, %s22
      %s25 = sphi 0, %s23
      %s37 = sphi 0, %s39
      %s40 = sphi 0, %s37
      %s41 = sphi 0, %s40
      %s57 = sphi 0, %s41
      %s65 = sphi 0, %s67
      %s68 = sphi 0, %s65
      %s69 = sphi 0, %s68
      %s85 = sphi 0, %s69
      %s89 = sphi 0, %s89
      %s91 = sphi 0, %s89
      %s92 = sphi 0, %s91
      %s106 = sphi 0, %s92
      %s110 = sphi 0, %s110
      %s112 = sphi 0, %s110
      %s113 = sphi 0, %s112
      %s127 = sphi 0, %s113
      %s135 = sphi 0, %s137
      %s138 = sphi 0, %s135
      %s139 = sphi 0, %s138
      %s155 = sphi 0, %s139
    $region4: #{tpu_custom_call.1} parent=1 // loop_header_branch
      %16 = sbr.rel (%p14) target = $region8
    $region5: #{tpu_custom_call.1} parent=1 // loop_body
      %s18 = ssub.s32 %s13, 1
      %s19 = ssub.s32 %s13, 2
      %s26 = sadd.s32 1, %s21
      %p27 = scmp.ge.s32.totalorder %s26, 1
      %s28 = scalar_select %p27, 0, %s26
      %s29 = sadd.s32 1, %s20
      %s30 = scalar_select %p27, %s29, %s20
      %p31 = scmp.ge.s32.totalorder %s30, 4
      %s32 = scalar_select %p31, 0, %s30
      %s33 = ssub.s32 %s21, %s28
      %s34 = ssub.s32 %s20, %s32
      %s35 = sor.u32 %s33, %s34
      %p36 = scmp.eq.s32.totalorder %s35, 0
      %s38 = sadd.s32 %s37, 1
      %s39 = scalar_select %p36, %s37, %s38
      %p42 = pneg %p36
      %p43 = scmp.eq.s32.totalorder %s13, 3
      %p44 = por %p42, %p43
      %p45 = scmp.ne.s32.totalorder %s37, %s40
      %p46 = scmp.eq.s32.totalorder %s13, 0
      %p47 = por %p45, %p46
      %p48 = scmp.ne.s32.totalorder %s37, %s40
      %p49 = scmp.eq.s32.totalorder %s18, 3
      %p50 = por %p48, %p49
      %p51 = scmp.ne.s32.totalorder %s40, %s41
      %p52 = scmp.eq.s32.totalorder %s18, 0
      %p53 = por %p51, %p52
      %p54 = scmp.ne.s32.totalorder %s40, %s41
      %p55 = scmp.eq.s32.totalorder %s19, 3
      %p56 = por %p54, %p55
      %p58 = scmp.ne.s32.totalorder %s41, %s57
      %p59 = scmp.eq.s32.totalorder %s19, 0
      %p60 = por %p58, %p59
      %s61 = ssub.s32 %s21, %s28
      %s62 = ssub.s32 %s20, %s32
      %s63 = sor.u32 %s61, %s62
      %p64 = scmp.eq.s32.totalorder %s63, 0
      %s66 = sadd.s32 %s65, 1
      %s67 = scalar_select %p64, %s65, %s66
      %p70 = pneg %p64
      %p71 = scmp.eq.s32.totalorder %s13, 3
      %p72 = por %p70, %p71
      %p73 = scmp.ne.s32.totalorder %s65, %s68
      %p74 = scmp.eq.s32.totalorder %s13, 0
      %p75 = por %p73, %p74
      %p76 = scmp.ne.s32.totalorder %s65, %s68
      %p77 = scmp.eq.s32.totalorder %s18, 3
      %p78 = por %p76, %p77
      %p79 = scmp.ne.s32.totalorder %s68, %s69
      %p80 = scmp.eq.s32.totalorder %s18, 0
      %p81 = por %p79, %p80
      %p82 = scmp.ne.s32.totalorder %s68, %s69
      %p83 = scmp.eq.s32.totalorder %s19, 3
      %p84 = por %p82, %p83
      %p86 = scmp.ne.s32.totalorder %s69, %s85
      %p87 = scmp.eq.s32.totalorder %s19, 0
      %p88 = por %p86, %p87
      %s90 = sadd.s32 %s89, 1
      %p93 = scmp.eq.s32.totalorder %s13, 3
      %p94 = scmp.ne.s32.totalorder %s89, %s91
      %p95 = scmp.eq.s32.totalorder %s13, 0
      %p96 = por %p94, %p95
      %p97 = scmp.ne.s32.totalorder %s89, %s91
      %p98 = scmp.eq.s32.totalorder %s18, 3
      %p99 = por %p97, %p98
      %p100 = scmp.ne.s32.totalorder %s91, %s92
      %p101 = scmp.eq.s32.totalorder %s18, 0
      %p102 = por %p100, %p101
      %p103 = scmp.ne.s32.totalorder %s91, %s92
      %p104 = scmp.eq.s32.totalorder %s19, 3
      %p105 = por %p103, %p104
      %p107 = scmp.ne.s32.totalorder %s92, %s106
      %p108 = scmp.eq.s32.totalorder %s19, 0
      %p109 = por %p107, %p108
      %s111 = sadd.s32 %s110, 1
      %p114 = scmp.eq.s32.totalorder %s13, 3
      %p115 = scmp.ne.s32.totalorder %s110, %s112
      %p116 = scmp.eq.s32.totalorder %s13, 0
      %p117 = por %p115, %p116
      %p118 = scmp.ne.s32.totalorder %s110, %s112
      %p119 = scmp.eq.s32.totalorder %s18, 3
      %p120 = por %p118, %p119
      %p121 = scmp.ne.s32.totalorder %s112, %s113
      %p122 = scmp.eq.s32.totalorder %s18, 0
      %p123 = por %p121, %p122
      %p124 = scmp.ne.s32.totalorder %s112, %s113
      %p125 = scmp.eq.s32.totalorder %s19, 3
      %p126 = por %p124, %p125
      %p128 = scmp.ne.s32.totalorder %s113, %s127
      %p129 = scmp.eq.s32.totalorder %s19, 0
      %p130 = por %p128, %p129
      %s131 = ssub.s32 %s21, %s28
      %s132 = ssub.s32 %s20, %s32
      %s133 = sor.u32 %s131, %s132
      %p134 = scmp.eq.s32.totalorder %s133, 0
      %s136 = sadd.s32 %s135, 1
      %s137 = scalar_select %p134, %s135, %s136
      %p140 = pneg %p134
      %p141 = scmp.eq.s32.totalorder %s13, 3
      %p142 = por %p140, %p141
      %p143 = scmp.ne.s32.totalorder %s135, %s138
      %p144 = scmp.eq.s32.totalorder %s13, 0
      %p145 = por %p143, %p144
      %p146 = scmp.ne.s32.totalorder %s135, %s138
      %p147 = scmp.eq.s32.totalorder %s18, 3
      %p148 = por %p146, %p147
      %p149 = scmp.ne.s32.totalorder %s138, %s139
      %p150 = scmp.eq.s32.totalorder %s18, 0
      %p151 = por %p149, %p150
      %p152 = scmp.ne.s32.totalorder %s138, %s139
      %p153 = scmp.eq.s32.totalorder %s19, 3
      %p154 = por %p152, %p153
      %p156 = scmp.ne.s32.totalorder %s139, %s155
      %p157 = scmp.eq.s32.totalorder %s19, 0
      %p158 = por %p156, %p157
      %p159 = scmp.le.s32.totalorder 1, %s13
      %p160 = scmp.lt.s32.totalorder %s13, 5
      %p161 = pnand %p159, %p160
      %p162 = pneg %p161
      // Predicated region
      $region9: #{tpu_custom_call.1} parent=5 // pred_check
        _
      $region10: #{tpu_custom_call.1} parent=5 // pred_check_branch
        %164 = sbr.rel (%p161) target = $region12
      $region11: #{tpu_custom_call.1} parent=5 // pred_region
        %s165 = ssub.s32 %s13, 1
        // Predicated region
        $region13: #{tpu_custom_call.1} parent=11 // pred_check
          %p166 = pneg %p102
        $region14: #{tpu_custom_call.1} parent=11 // pred_check_branch
          %168 = sbr.rel (%p166) target = $region16
        $region15: #{tpu_custom_call.1} parent=11 // pred_region
          _
        $region16: #{tpu_custom_call.1} parent=11 // pred_fallthru
          _
        // Predicated region
        $region17: #{tpu_custom_call.1} parent=11 // pred_check
          %p169 = pneg %p123
        $region18: #{tpu_custom_call.1} parent=11 // pred_check_branch
          %171 = sbr.rel (%p169) target = $region20
        $region19: #{tpu_custom_call.1} parent=11 // pred_region
          _
        $region20: #{tpu_custom_call.1} parent=11 // pred_fallthru
          _
      $region12: #{tpu_custom_call.1} parent=5 // pred_fallthru
        _
      %p172 = scmp.lt.s32.totalorder %s13, 4
      // Predicated region
      $region21: #{tpu_custom_call.1} parent=5 // pred_check
        %p173 = pneg %p172
      $region22: #{tpu_custom_call.1} parent=5 // pred_check_branch
        %175 = sbr.rel (%p173) target = $region24
      $region23: #{tpu_custom_call.1} parent=5 // pred_region
        // Predicated region
        $region25: #{tpu_custom_call.1} parent=23 // pred_check
          %p176 = pneg %p47
        $region26: #{tpu_custom_call.1} parent=23 // pred_check_branch
          %178 = sbr.rel (%p176) target = $region28
        $region27: #{tpu_custom_call.1} parent=23 // pred_region
          %s179 = smul.u32 8, %s20
          %p180 = scmp.lt.s32.totalorder %s21, 0
          %s181 = scalar_select %p180, %s21, 0
          %p182 = scmp.lt.s32.totalorder %s179, 31
          %s183 = scalar_select %p182, %s179, 31
          %s184 = smul.addr %s183, 4
          %s185 = smul.addr %s181, 128
          %s186 = sadd.s32 %s184, %s185
          %s187 = smul.addr %s186, 8
          %s188 = scalar_lea.vmem %s0, %s187
          %s189 = smul.u32 8, %s20
        $region28: #{tpu_custom_call.1} parent=23 // pred_fallthru
          _
        // Predicated region
        $region29: #{tpu_custom_call.1} parent=23 // pred_check
          %p190 = pneg %p75
        $region30: #{tpu_custom_call.1} parent=23 // pred_check_branch
          %192 = sbr.rel (%p190) target = $region32
        $region31: #{tpu_custom_call.1} parent=23 // pred_region
          %p193 = scmp.lt.s32.totalorder %s21, 0
          %s194 = scalar_select %p193, %s21, 0
          %p195 = scmp.lt.s32.totalorder %s20, 3
          %s196 = scalar_select %p195, %s20, 3
          %s197 = smul.addr %s196, 8
          %s198 = smul.addr %s194, 32
          %s199 = sadd.s32 %s197, %s198
          %s200 = smul.addr %s199, 8
          %s201 = scalar_lea.vmem %s1, %s200
        $region32: #{tpu_custom_call.1} parent=23 // pred_fallthru
          _
      $region24: #{tpu_custom_call.1} parent=5 // pred_fallthru
        _
      %p202 = scmp.le.s32.totalorder 1, %s13
      %p203 = scmp.lt.s32.totalorder %s13, 5
      %p204 = pnand %p202, %p203
      %p205 = pneg %p204
      // Predicated region
      $region33: #{tpu_custom_call.1} parent=5 // pred_check
        _
      $region34: #{tpu_custom_call.1} parent=5 // pred_check_branch
        %207 = sbr.rel (%p204) target = $region36
      $region35: #{tpu_custom_call.1} parent=5 // pred_region
        %s208 = ssub.s32 %s13, 1
        %s209 = smul.u32 8, %s22
        %p210 = scmp.lt.s32.totalorder %s23, 0
        %s211 = scalar_select %p210, %s23, 0
        %p212 = scmp.lt.s32.totalorder %s209, 31
        %s213 = scalar_select %p212, %s209, 31
        %s214 = smul.addr %s213, 4
        %s215 = smul.addr %s211, 128
        %s216 = sadd.s32 %s214, %s215
        %s217 = smul.addr %s216, 8
        %s218 = scalar_lea.vmem %s0, %s217
        %p219 = pneg %p53
        %p220 = pneg %p50
        %p221 = scmp.lt.s32.totalorder %s23, 0
        %s222 = scalar_select %p221, %s23, 0
        %p223 = scmp.lt.s32.totalorder %s22, 3
        %s224 = scalar_select %p223, %s22, 3
        %s225 = smul.addr %s224, 8
        %s226 = smul.addr %s222, 32
        %s227 = sadd.s32 %s225, %s226
        %s228 = smul.addr %s227, 8
        %s229 = scalar_lea.vmem %s1, %s228
        %p230 = pneg %p81
        %p231 = pneg %p78
        %p232 = pneg %p102
        %p233 = pneg %p99
        %p234 = pneg %p123
        %p235 = pneg %p120
        %p236 = pneg %p151
        %p237 = pneg %p148
        %s238 = sand.u32 %s138, 1
        %s239 = scalar_lea.sflag [#allocation3], %s238
        %s240 = sand.u32 %s138, 1
        %s241 = smul.addr %s240, 256
        %s242 = scalar_lea.vmem [#allocation2], %s241
        %s243 = smul.u32 8, %s22
        %p244 = scmp.lt.s32.totalorder %s23, 0
        %s245 = scalar_select %p244, %s23, 0
        %p246 = scmp.lt.s32.totalorder %s243, 31
        %s247 = scalar_select %p246, %s243, 31
        %s248 = smul.addr %s247, 4
        %s249 = smul.addr %s245, 128
        %s250 = sadd.s32 %s248, %s249
        %s251 = smul.addr %s250, 8
        %s252 = scalar_lea.vmem %s0, %s251
        %s253 = smul.u32 8, %s22
        %p254 = scmp.lt.s32.totalorder %s23, 0
        %s255 = scalar_select %p254, %s23, 0
        %p256 = scmp.lt.s32.totalorder %s22, 3
        %s257 = scalar_select %p256, %s22, 3
        %s258 = smul.addr %s257, 8
        %s259 = smul.addr %s255, 32
        %s260 = sadd.s32 %s258, %s259
        %s261 = smul.addr %s260, 8
        %s262 = scalar_lea.vmem %s1, %s261
        %s263 = smul.u32 8, %s22
        %v265 = vld [vmem:[%s252] sm:$0xff]
        %v266 = vld [vmem:[%s252 + $0x8] sm:$0xff]
        %v267 = vld [vmem:[%s252 + $0x10] sm:$0xff]
        %v268 = vld [vmem:[%s252 + $0x18] sm:$0xff]
        %v269 = vld [vmem:[%s252 + $0x20] sm:$0xff]
        %v270 = vld [vmem:[%s252 + $0x28] sm:$0xff]
        %v271 = vld [vmem:[%s252 + $0x30] sm:$0xff]
        %v272 = vld [vmem:[%s252 + $0x38] sm:$0xff]
        %v273 = vld [vmem:[%s252 + $0x40] sm:$0xff]
        %v274 = vld [vmem:[%s252 + $0x48] sm:$0xff]
        %v275 = vld [vmem:[%s252 + $0x50] sm:$0xff]
        %v276 = vld [vmem:[%s252 + $0x58] sm:$0xff]
        %v277 = vld [vmem:[%s252 + $0x60] sm:$0xff]
        %v278 = vld [vmem:[%s252 + $0x68] sm:$0xff]
        %v279 = vld [vmem:[%s252 + $0x70] sm:$0xff]
        %v280 = vld [vmem:[%s252 + $0x78] sm:$0xff]
        %v281 = vld [vmem:[%s252 + $0x80] sm:$0xff]
        %v282 = vld [vmem:[%s252 + $0x88] sm:$0xff]
        %v283 = vld [vmem:[%s252 + $0x90] sm:$0xff]
        %v284 = vld [vmem:[%s252 + $0x98] sm:$0xff]
        %v285 = vld [vmem:[%s252 + $0xa0] sm:$0xff]
        %v286 = vld [vmem:[%s252 + $0xa8] sm:$0xff]
        %v287 = vld [vmem:[%s252 + $0xb0] sm:$0xff]
        %v288 = vld [vmem:[%s252 + $0xb8] sm:$0xff]
        %v289 = vld [vmem:[%s252 + $0xc0] sm:$0xff]
        %v290 = vld [vmem:[%s252 + $0xc8] sm:$0xff]
        %v291 = vld [vmem:[%s252 + $0xd0] sm:$0xff]
        %v292 = vld [vmem:[%s252 + $0xd8] sm:$0xff]
        %v293 = vld [vmem:[%s252 + $0xe0] sm:$0xff]
        %v294 = vld [vmem:[%s252 + $0xe8] sm:$0xff]
        %v295 = vld [vmem:[%s252 + $0xf0] sm:$0xff]
        %v296 = vld [vmem:[%s252 + $0xf8] sm:$0xff]
        %v297 = vpack.c.bf16 %v266, %v265
        %v298 = vpack.c.bf16 %v268, %v267
        %v299 = vpack.c.bf16 %v270, %v269
        %v300 = vpack.c.bf16 %v272, %v271
        %v301 = vpack.c.bf16 %v274, %v273
        %v302 = vpack.c.bf16 %v276, %v275
        %v303 = vpack.c.bf16 %v278, %v277
        %v304 = vpack.c.bf16 %v280, %v279
        %v305 = vpack.c.bf16 %v282, %v281
        %v306 = vpack.c.bf16 %v284, %v283
        %v307 = vpack.c.bf16 %v286, %v285
        %v308 = vpack.c.bf16 %v288, %v287
        %v309 = vpack.c.bf16 %v290, %v289
        %v310 = vpack.c.bf16 %v292, %v291
        %v311 = vpack.c.bf16 %v294, %v293
        %v312 = vpack.c.bf16 %v296, %v295
        %v313 = vld [vmem:[%s262] sm:$0xff]
        %v314 = vld [vmem:[%s262 + $0x8] sm:$0xff]
        %v315 = vld [vmem:[%s262 + $0x10] sm:$0xff]
        %v316 = vld [vmem:[%s262 + $0x18] sm:$0xff]
        %v317 = vld [vmem:[%s262 + $0x20] sm:$0xff]
        %v318 = vld [vmem:[%s262 + $0x28] sm:$0xff]
        %v319 = vld [vmem:[%s262 + $0x30] sm:$0xff]
        %v320 = vld [vmem:[%s262 + $0x38] sm:$0xff]
        %v321 = vpack.c.bf16 %v314, %v313
        %v322 = vpack.c.bf16 %v316, %v315
        %v323 = vpack.c.bf16 %v318, %v317
        %v324 = vpack.c.bf16 %v320, %v319
        %vm325 = vsmask.f32 256
        %v327 = vshrl.u32 %v321, 16
        %v329 = vrot.slane %v327, 7
        %v330 = vshll.u32 %v321, 16
        %v332 = vor.u32 %v329, %v330
        %v334 = vshrl.u32 %v322, 16
        %v336 = vrot.slane %v334, 7
        %v337 = vshll.u32 %v322, 16
        %v339 = vor.u32 %v336, %v337
        %v340 = vsel %vm325, %v329, %v339
        %v342 = vshrl.u32 %v297, 16
        %v344 = vrot.slane %v342, 7
        %v345 = vshll.u32 %v297, 16
        %v347 = vor.u32 %v344, %v345
        %v349 = vshrl.u32 %v298, 16
        %v351 = vrot.slane %v349, 7
        %v352 = vshll.u32 %v298, 16
        %v354 = vor.u32 %v351, %v352
        %v355 = vsel %vm325, %v344, %v354
        %v357 = vshrl.u32 %v299, 16
        %v359 = vrot.slane %v357, 7
        %v360 = vshll.u32 %v299, 16
        %v362 = vor.u32 %v359, %v360
        %v364 = vshrl.u32 %v300, 16
        %v366 = vrot.slane %v364, 7
        %v367 = vshll.u32 %v300, 16
        %v369 = vor.u32 %v366, %v367
        %v370 = vsel %vm325, %v359, %v369
        %v372 = vshrl.u32 %v301, 16
        %v374 = vrot.slane %v372, 7
        %v375 = vshll.u32 %v301, 16
        %v377 = vor.u32 %v374, %v375
        %v379 = vshrl.u32 %v302, 16
        %v381 = vrot.slane %v379, 7
        %v382 = vshll.u32 %v302, 16
        %v384 = vor.u32 %v381, %v382
        %v385 = vsel %vm325, %v374, %v384
        %v387 = vshrl.u32 %v303, 16
        %v389 = vrot.slane %v387, 7
        %v390 = vshll.u32 %v303, 16
        %v392 = vor.u32 %v389, %v390
        %v394 = vshrl.u32 %v304, 16
        %v396 = vrot.slane %v394, 7
        %v397 = vshll.u32 %v304, 16
        %v399 = vor.u32 %v396, %v397
        %v400 = vsel %vm325, %v389, %v399
        %v402 = vshrl.u32 %v305, 16
        %v404 = vrot.slane %v402, 7
        %v405 = vshll.u32 %v305, 16
        %v407 = vor.u32 %v404, %v405
        %v409 = vshrl.u32 %v306, 16
        %v411 = vrot.slane %v409, 7
        %v412 = vshll.u32 %v306, 16
        %v414 = vor.u32 %v411, %v412
        %v415 = vsel %vm325, %v404, %v414
        %v417 = vshrl.u32 %v307, 16
        %v419 = vrot.slane %v417, 7
        %v420 = vshll.u32 %v307, 16
        %v422 = vor.u32 %v419, %v420
        %v424 = vshrl.u32 %v308, 16
        %v426 = vrot.slane %v424, 7
        %v427 = vshll.u32 %v308, 16
        %v429 = vor.u32 %v426, %v427
        %v430 = vsel %vm325, %v419, %v429
        %v432 = vshrl.u32 %v309, 16
        %v434 = vrot.slane %v432, 7
        %v435 = vshll.u32 %v309, 16
        %v437 = vor.u32 %v434, %v435
        %v439 = vshrl.u32 %v310, 16
        %v441 = vrot.slane %v439, 7
        %v442 = vshll.u32 %v310, 16
        %v444 = vor.u32 %v441, %v442
        %v445 = vsel %vm325, %v434, %v444
        %v447 = vshrl.u32 %v311, 16
        %v449 = vrot.slane %v447, 7
        %v450 = vshll.u32 %v311, 16
        %v452 = vor.u32 %v449, %v450
        %v454 = vshrl.u32 %v312, 16
        %v456 = vrot.slane %v454, 7
        %v457 = vshll.u32 %v312, 16
        %v459 = vor.u32 %v456, %v457
        %v460 = vsel %vm325, %v449, %v459
        %v462 = vshrl.u32 %v323, 16
        %v464 = vrot.slane %v462, 7
        %v465 = vshll.u32 %v323, 16
        %v467 = vor.u32 %v464, %v465
        %v469 = vshrl.u32 %v324, 16
        %v471 = vrot.slane %v469, 7
        %v472 = vshll.u32 %v324, 16
        %v474 = vor.u32 %v471, %v472
        %v475 = vsel %vm325, %v464, %v474
        %vm496 = vcmask 1040384
        %vm497 = vmand %vm496, %vm325
        %v498 = vsel %vm497, 0, %v332
        %v499 = vsel %vm497, 0, %v347
        %v500 = vsel %vm497, 0, %v362
        %v501 = vsel %vm497, 0, %v377
        %v502 = vsel %vm497, 0, %v392
        %v503 = vsel %vm497, 0, %v407
        %v504 = vsel %vm497, 0, %v422
        %v505 = vsel %vm497, 0, %v437
        %v506 = vsel %vm497, 0, %v452
        %v507 = vsel %vm497, 0, %v467
        %v508 = vsel %vm497, %v336, 0
        %v509 = vsel %vm497, %v351, 0
        %v510 = vsel %vm497, %v366, 0
        %v511 = vsel %vm497, %v381, 0
        %v512 = vsel %vm497, %v396, 0
        %v513 = vsel %vm497, %v411, 0
        %v514 = vsel %vm497, %v426, 0
        %v515 = vsel %vm497, %v441, 0
        %v516 = vsel %vm497, %v456, 0
        %v517 = vsel %vm497, %v471, 0
        %v518 = vld [vmem:[%s2] sm:$0xf]
        %v519 = vld [vmem:[%s2 + $0x4] sm:$0xf]
        %vm520 = vsmask.f32 7424
        %v522 = vshrl.u32 %v498, 16
        %v524 = vshll.u32 %v498, 16
        %v526 = vrot.slane %v524, 1
        %v527 = vor.u32 %v522, %v526
        %v529 = vshll.u32 %v340, 16
        %v531 = vrot.slane %v529, 1
        %v532 = vsel %vm520, %v527, %v531
        %v533 = vshrl.u32 %v340, 16
        %v535 = vor.u32 %v533, %v531
        %v537 = vshll.u32 %v508, 16
        %v539 = vrot.slane %v537, 1
        %v540 = vsel %vm520, %v535, %v539
        %v542 = vshrl.u32 %v499, 16
        %v544 = vshll.u32 %v499, 16
        %v546 = vrot.slane %v544, 1
        %v547 = vor.u32 %v542, %v546
        %v549 = vshll.u32 %v355, 16
        %v551 = vrot.slane %v549, 1
        %v552 = vsel %vm520, %v547, %v551
        %v553 = vshrl.u32 %v355, 16
        %v555 = vor.u32 %v553, %v551
        %v557 = vshll.u32 %v509, 16
        %v559 = vrot.slane %v557, 1
        %v560 = vsel %vm520, %v555, %v559
        %v562 = vshrl.u32 %v500, 16
        %v564 = vshll.u32 %v500, 16
        %v566 = vrot.slane %v564, 1
        %v567 = vor.u32 %v562, %v566
        %v569 = vshll.u32 %v370, 16
        %v571 = vrot.slane %v569, 1
        %v572 = vsel %vm520, %v567, %v571
        %v573 = vshrl.u32 %v370, 16
        %v575 = vor.u32 %v573, %v571
        %v577 = vshll.u32 %v510, 16
        %v579 = vrot.slane %v577, 1
        %v580 = vsel %vm520, %v575, %v579
        %v582 = vshrl.u32 %v501, 16
        %v584 = vshll.u32 %v501, 16
        %v586 = vrot.slane %v584, 1
        %v587 = vor.u32 %v582, %v586
        %v589 = vshll.u32 %v385, 16
        %v591 = vrot.slane %v589, 1
        %v592 = vsel %vm520, %v587, %v591
        %v593 = vshrl.u32 %v385, 16
        %v595 = vor.u32 %v593, %v591
        %v597 = vshll.u32 %v511, 16
        %v599 = vrot.slane %v597, 1
        %v600 = vsel %vm520, %v595, %v599
        %v602 = vshrl.u32 %v502, 16
        %v604 = vshll.u32 %v502, 16
        %v606 = vrot.slane %v604, 1
        %v607 = vor.u32 %v602, %v606
        %v609 = vshll.u32 %v400, 16
        %v611 = vrot.slane %v609, 1
        %v612 = vsel %vm520, %v607, %v611
        %v613 = vshrl.u32 %v400, 16
        %v615 = vor.u32 %v613, %v611
        %v617 = vshll.u32 %v512, 16
        %v619 = vrot.slane %v617, 1
        %v620 = vsel %vm520, %v615, %v619
        %v622 = vshrl.u32 %v503, 16
        %v624 = vshll.u32 %v503, 16
        %v626 = vrot.slane %v624, 1
        %v627 = vor.u32 %v622, %v626
        %v629 = vshll.u32 %v415, 16
        %v631 = vrot.slane %v629, 1
        %v632 = vsel %vm520, %v627, %v631
        %v633 = vshrl.u32 %v415, 16
        %v635 = vor.u32 %v633, %v631
        %v637 = vshll.u32 %v513, 16
        %v639 = vrot.slane %v637, 1
        %v640 = vsel %vm520, %v635, %v639
        %v642 = vshrl.u32 %v504, 16
        %v644 = vshll.u32 %v504, 16
        %v646 = vrot.slane %v644, 1
        %v647 = vor.u32 %v642, %v646
        %v649 = vshll.u32 %v430, 16
        %v651 = vrot.slane %v649, 1
        %v652 = vsel %vm520, %v647, %v651
        %v653 = vshrl.u32 %v430, 16
        %v655 = vor.u32 %v653, %v651
        %v657 = vshll.u32 %v514, 16
        %v659 = vrot.slane %v657, 1
        %v660 = vsel %vm520, %v655, %v659
        %v662 = vshrl.u32 %v505, 16
        %v664 = vshll.u32 %v505, 16
        %v666 = vrot.slane %v664, 1
        %v667 = vor.u32 %v662, %v666
        %v669 = vshll.u32 %v445, 16
        %v671 = vrot.slane %v669, 1
        %v672 = vsel %vm520, %v667, %v671
        %v673 = vshrl.u32 %v445, 16
        %v675 = vor.u32 %v673, %v671
        %v677 = vshll.u32 %v515, 16
        %v679 = vrot.slane %v677, 1
        %v680 = vsel %vm520, %v675, %v679
        %v681 = vld [vmem:[%s2 + $0x8] sm:$0xf]
        %v682 = vld [vmem:[%s2 + $0xc] sm:$0xf]
        %v685 = vunpack.c.l.b16 %v681
        %v686 = vunpack.c.l.b16 %v682
        %v687 = vpack.c.b16 %v686, %v685
        %vm689 = vcmask 130048
        %v691 = vsel %vm689, %v532, 0
        %v694 = vsel %vm689, %v540, 0
        %v697 = vsel %vm689, %v552, 0
        %v700 = vsel %vm689, %v560, 0
        %v703 = vsel %vm689, %v572, 0
        %v706 = vsel %vm689, %v580, 0
        %v709 = vsel %vm689, %v592, 0
        %v712 = vsel %vm689, %v600, 0
        %v715 = vsel %vm689, %v612, 0
        %v718 = vsel %vm689, %v620, 0
        %v721 = vsel %vm689, %v632, 0
        %v724 = vsel %vm689, %v640, 0
        %v727 = vsel %vm689, %v652, 0
        %v730 = vsel %vm689, %v660, 0
        %v733 = vsel %vm689, %v672, 0
        %v736 = vsel %vm689, %v680, 0
        %738 = vmatprep.subr.bf16.mxu0 0
        %739 = vmatpush1.bf16.msra.mxu0 %v687
        %740 = vmatprep.subr.bf16.mxu0 0
        %741 = vmatpush1.bf16.msra.mxu0 0
        %742 = vmatprep.subr.bf16.mxu0 0
        %743 = vmatpush1.bf16.msra.mxu0 0
        %744 = vmatprep.subr.bf16.mxu0 0
        %745 = vmatpush1.bf16.msra.mxu0 0
        %746 = vmatprep.subr.bf16.mxu0 0
        %747 = vmatpush1.bf16.msra.mxu0 0
        %748 = vmatprep.subr.bf16.mxu0 0
        %749 = vmatpush1.bf16.msra.mxu0 0
        %750 = vmatprep.subr.bf16.mxu0 0
        %751 = vmatpush1.bf16.msra.mxu0 0
        %752 = vmatprep.subr.bf16.mxu0 0
        %753 = vmatpush1.bf16.msra.mxu0 0
        %754 = vmatprep.subr.bf16.mxu0 0
        %755 = vmatpush1.bf16.msra.mxu0 0
        %756 = vmatprep.subr.bf16.mxu0 0
        %757 = vmatpush1.bf16.msra.mxu0 0
        %758 = vmatprep.subr.bf16.mxu0 0
        %759 = vmatpush1.bf16.msra.mxu0 0
        %760 = vmatprep.subr.bf16.mxu0 0
        %761 = vmatpush1.bf16.msra.mxu0 0
        %762 = vmatprep.subr.bf16.mxu0 0
        %763 = vmatpush1.bf16.msra.mxu0 0
        %764 = vmatprep.subr.bf16.mxu0 0
        %765 = vmatpush1.bf16.msra.mxu0 0
        %766 = vmatprep.subr.bf16.mxu0 0
        %767 = vmatpush1.bf16.msra.mxu0 0
        %768 = vmatprep.subr.bf16.mxu0 0
        %769 = vmatpush1.bf16.msra.mxu0 0
        %770 = vmatprep.mubr.bf16.mxu0 0
        %771 = vmatmul.mubr.bf16.gmra.mrb[0].mxu0 %v691
        %v772 = vpop.f32.mrb[0].mxu0
        %v773 = vadd.f32 0.0, %v772
        %v774 = vpop.f32.mrb[0].mxu0
        %v775 = vpop.f32.mrb[0].mxu0
        %v776 = vadd.f32 0.0, %v775
        %v777 = vpop.f32.mrb[0].mxu0
        %778 = vmatprep.mubr.bf16.mxu0 0
        %779 = vmatmul.mubr.bf16.gmra.mrb[0].mxu0 %v694
        %v780 = vpop.f32.mrb[0].mxu0
        %v781 = vadd.f32 0.0, %v780
        %v782 = vpop.f32.mrb[0].mxu0
        %v783 = vpop.f32.mrb[0].mxu0
        %v784 = vadd.f32 0.0, %v783
        %v785 = vpop.f32.mrb[0].mxu0
        %786 = vmatprep.mubr.bf16.mxu0 0
        %787 = vmatmul.mubr.bf16.gmra.mrb[0].mxu0 %v697
        %v788 = vpop.f32.mrb[0].mxu0
        %v789 = vadd.f32 0.0, %v788
        %v790 = vpop.f32.mrb[0].mxu0
        %v791 = vpop.f32.mrb[0].mxu0
        %v792 = vadd.f32 0.0, %v791
        %v793 = vpop.f32.mrb[0].mxu0
        %794 = vmatprep.mubr.bf16.mxu0 0
        %795 = vmatmul.mubr.bf16.gmra.mrb[0].mxu0 %v700
        %v796 = vpop.f32.mrb[0].mxu0
        %v797 = vadd.f32 0.0, %v796
        %v798 = vpop.f32.mrb[0].mxu0
        %v799 = vpop.f32.mrb[0].mxu0
        %v800 = vadd.f32 0.0, %v799
        %v801 = vpop.f32.mrb[0].mxu0
        %802 = vmatprep.mubr.bf16.mxu0 0
        %803 = vmatmul.mubr.bf16.gmra.mrb[0].mxu0 %v703
        %v804 = vpop.f32.mrb[0].mxu0
        %v805 = vadd.f32 0.0, %v804
        %v806 = vpop.f32.mrb[0].mxu0
        %v807 = vpop.f32.mrb[0].mxu0
        %v808 = vadd.f32 0.0, %v807
        %v809 = vpop.f32.mrb[0].mxu0
        %810 = vmatprep.mubr.bf16.mxu0 0
        %811 = vmatmul.mubr.bf16.gmra.mrb[0].mxu0 %v706
        %v812 = vpop.f32.mrb[0].mxu0
        %v813 = vadd.f32 0.0, %v812
        %v814 = vpop.f32.mrb[0].mxu0
        %v815 = vpop.f32.mrb[0].mxu0
        %v816 = vadd.f32 0.0, %v815
        %v817 = vpop.f32.mrb[0].mxu0
        %818 = vmatprep.mubr.bf16.mxu0 0
        %819 = vmatmul.mubr.bf16.gmra.mrb[0].mxu0 %v709
        %v820 = vpop.f32.mrb[0].mxu0
        %v821 = vadd.f32 0.0, %v820
        %v822 = vpop.f32.mrb[0].mxu0
        %v823 = vpop.f32.mrb[0].mxu0
        %v824 = vadd.f32 0.0, %v823
        %v825 = vpop.f32.mrb[0].mxu0
        %826 = vmatprep.mubr.bf16.mxu0 0
        %827 = vmatmul.mubr.bf16.gmra.mrb[0].mxu0 %v712
        %v828 = vpop.f32.mrb[0].mxu0
        %v829 = vadd.f32 0.0, %v828
        %v830 = vpop.f32.mrb[0].mxu0
        %v831 = vpop.f32.mrb[0].mxu0
        %v832 = vadd.f32 0.0, %v831
        %v833 = vpop.f32.mrb[0].mxu0
        %834 = vmatprep.mubr.bf16.mxu0 0
        %835 = vmatmul.mubr.bf16.gmra.mrb[0].mxu0 %v715
        %v836 = vpop.f32.mrb[0].mxu0
        %v837 = vadd.f32 0.0, %v836
        %v838 = vpop.f32.mrb[0].mxu0
        %v839 = vpop.f32.mrb[0].mxu0
        %v840 = vadd.f32 0.0, %v839
        %v841 = vpop.f32.mrb[0].mxu0
        %842 = vmatprep.mubr.bf16.mxu0 0
        %843 = vmatmul.mubr.bf16.gmra.mrb[0].mxu0 %v718
        %v844 = vpop.f32.mrb[0].mxu0
        %v845 = vadd.f32 0.0, %v844
        %v846 = vpop.f32.mrb[0].mxu0
        %v847 = vpop.f32.mrb[0].mxu0
        %v848 = vadd.f32 0.0, %v847
        %v849 = vpop.f32.mrb[0].mxu0
        %850 = vmatprep.mubr.bf16.mxu0 0
        %851 = vmatmul.mubr.bf16.gmra.mrb[0].mxu0 %v721
        %v852 = vpop.f32.mrb[0].mxu0
        %v853 = vadd.f32 0.0, %v852
        %v854 = vpop.f32.mrb[0].mxu0
        %v855 = vpop.f32.mrb[0].mxu0
        %v856 = vadd.f32 0.0, %v855
        %v857 = vpop.f32.mrb[0].mxu0
        %858 = vmatprep.mubr.bf16.mxu0 0
        %859 = vmatmul.mubr.bf16.gmra.mrb[0].mxu0 %v724
        %v860 = vpop.f32.mrb[0].mxu0
        %v861 = vadd.f32 0.0, %v860
        %v862 = vpop.f32.mrb[0].mxu0
        %v863 = vpop.f32.mrb[0].mxu0
        %v864 = vadd.f32 0.0, %v863
        %v865 = vpop.f32.mrb[0].mxu0
        %866 = vmatprep.mubr.bf16.mxu0 0
        %867 = vmatmul.mubr.bf16.gmra.mrb[0].mxu0 %v727
        %v868 = vpop.f32.mrb[0].mxu0
        %v869 = vadd.f32 0.0, %v868
        %v870 = vpop.f32.mrb[0].mxu0
        %v871 = vpop.f32.mrb[0].mxu0
        %v872 = vadd.f32 0.0, %v871
        %v873 = vpop.f32.mrb[0].mxu0
        %874 = vmatprep.mubr.bf16.mxu0 0
        %875 = vmatmul.mubr.bf16.gmra.mrb[0].mxu0 %v730
        %v876 = vpop.f32.mrb[0].mxu0
        %v877 = vadd.f32 0.0, %v876
        %v878 = vpop.f32.mrb[0].mxu0
        %v879 = vpop.f32.mrb[0].mxu0
        %v880 = vadd.f32 0.0, %v879
        %v881 = vpop.f32.mrb[0].mxu0
        %882 = vmatprep.mubr.bf16.mxu0 0
        %883 = vmatmul.mubr.bf16.gmra.mrb[0].mxu0 %v733
        %v884 = vpop.f32.mrb[0].mxu0
        %v885 = vadd.f32 0.0, %v884
        %v886 = vpop.f32.mrb[0].mxu0
        %v887 = vpop.f32.mrb[0].mxu0
        %v888 = vadd.f32 0.0, %v887
        %v889 = vpop.f32.mrb[0].mxu0
        %890 = vmatprep.mubr.bf16.mxu0 0
        %891 = vmatmul.mubr.bf16.gmra.mrb[0].mxu0 %v736
        %v892 = vpop.f32.mrb[0].mxu0
        %v893 = vadd.f32 0.0, %v892
        %v894 = vpop.f32.mrb[0].mxu0
        %v895 = vpop.f32.mrb[0].mxu0
        %v896 = vadd.f32 0.0, %v895
        %v897 = vpop.f32.mrb[0].mxu0
        %898 = vdwg.mxu0
        %v901 = vunpack.c.l.b16 %v518
        %v902 = vunpack.c.l.b16 %v519
        %v903 = vpack.c.b16 %v902, %v901
        %v905 = vsel %vm689, %v498, 0
        %v907 = vsel %vm689, %v340, 0
        %v909 = vsel %vm689, %v499, 0
        %v911 = vsel %vm689, %v355, 0
        %v913 = vsel %vm689, %v500, 0
        %v915 = vsel %vm689, %v370, 0
        %v917 = vsel %vm689, %v501, 0
        %v919 = vsel %vm689, %v385, 0
        %v921 = vsel %vm689, %v502, 0
        %v923 = vsel %vm689, %v400, 0
        %v925 = vsel %vm689, %v503, 0
        %v927 = vsel %vm689, %v415, 0
        %v929 = vsel %vm689, %v504, 0
        %v931 = vsel %vm689, %v430, 0
        %v933 = vsel %vm689, %v505, 0
        %v935 = vsel %vm689, %v445, 0
        %937 = vmatprep.subr.bf16.mxu0 0
        %938 = vmatpush1.bf16.msra.mxu0 %v903
        %939 = vmatprep.subr.bf16.mxu0 0
        %940 = vmatpush1.bf16.msra.mxu0 0
        %941 = vmatprep.subr.bf16.mxu0 0
        %942 = vmatpush1.bf16.msra.mxu0 0
        %943 = vmatprep.subr.bf16.mxu0 0
        %944 = vmatpush1.bf16.msra.mxu0 0
        %945 = vmatprep.subr.bf16.mxu0 0
        %946 = vmatpush1.bf16.msra.mxu0 0
        %947 = vmatprep.subr.bf16.mxu0 0
        %948 = vmatpush1.bf16.msra.mxu0 0
        %949 = vmatprep.subr.bf16.mxu0 0
        %950 = vmatpush1.bf16.msra.mxu0 0
        %951 = vmatprep.subr.bf16.mxu0 0
        %952 = vmatpush1.bf16.msra.mxu0 0
        %953 = vmatprep.subr.bf16.mxu0 0
        %954 = vmatpush1.bf16.msra.mxu0 0
        %955 = vmatprep.subr.bf16.mxu0 0
        %956 = vmatpush1.bf16.msra.mxu0 0
        %957 = vmatprep.subr.bf16.mxu0 0
        %958 = vmatpush1.bf16.msra.mxu0 0
        %959 = vmatprep.subr.bf16.mxu0 0
        %960 = vmatpush1.bf16.msra.mxu0 0
        %961 = vmatprep.subr.bf16.mxu0 0
        %962 = vmatpush1.bf16.msra.mxu0 0
        %963 = vmatprep.subr.bf16.mxu0 0
        %964 = vmatpush1.bf16.msra.mxu0 0
        %965 = vmatprep.subr.bf16.mxu0 0
        %966 = vmatpush1.bf16.msra.mxu0 0
        %967 = vmatprep.subr.bf16.mxu0 0
        %968 = vmatpush1.bf16.msra.mxu0 0
        %969 = vmatprep.mubr.bf16.mxu0 0
        %970 = vmatmul.mubr.bf16.gmra.mrb[0].mxu0 %v905
        %v971 = vpop.f32.mrb[0].mxu0
        %v972 = vadd.f32 %v773, %v971
        %v973 = vpop.f32.mrb[0].mxu0
        %v974 = vpop.f32.mrb[0].mxu0
        %v975 = vadd.f32 %v776, %v974
        %v976 = vpop.f32.mrb[0].mxu0
        %977 = vmatprep.mubr.bf16.mxu0 0
        %978 = vmatmul.mubr.bf16.gmra.mrb[0].mxu0 %v907
        %v979 = vpop.f32.mrb[0].mxu0
        %v980 = vadd.f32 %v781, %v979
        %v981 = vpop.f32.mrb[0].mxu0
        %v982 = vpop.f32.mrb[0].mxu0
        %v983 = vadd.f32 %v784, %v982
        %v984 = vpop.f32.mrb[0].mxu0
        %985 = vmatprep.mubr.bf16.mxu0 0
        %986 = vmatmul.mubr.bf16.gmra.mrb[0].mxu0 %v909
        %v987 = vpop.f32.mrb[0].mxu0
        %v988 = vadd.f32 %v789, %v987
        %v989 = vpop.f32.mrb[0].mxu0
        %v990 = vpop.f32.mrb[0].mxu0
        %v991 = vadd.f32 %v792, %v990
        %v992 = vpop.f32.mrb[0].mxu0
        %993 = vmatprep.mubr.bf16.mxu0 0
        %994 = vmatmul.mubr.bf16.gmra.mrb[0].mxu0 %v911
        %v995 = vpop.f32.mrb[0].mxu0
        %v996 = vadd.f32 %v797, %v995
        %v997 = vpop.f32.mrb[0].mxu0
        %v998 = vpop.f32.mrb[0].mxu0
        %v999 = vadd.f32 %v800, %v998
        %v1000 = vpop.f32.mrb[0].mxu0
        %1001 = vmatprep.mubr.bf16.mxu0 0
        %1002 = vmatmul.mubr.bf16.gmra.mrb[0].mxu0 %v913
        %v1003 = vpop.f32.mrb[0].mxu0
        %v1004 = vadd.f32 %v805, %v1003
        %v1005 = vpop.f32.mrb[0].mxu0
        %v1006 = vpop.f32.mrb[0].mxu0
        %v1007 = vadd.f32 %v808, %v1006
        %v1008 = vpop.f32.mrb[0].mxu0
        %1009 = vmatprep.mubr.bf16.mxu0 0
        %1010 = vmatmul.mubr.bf16.gmra.mrb[0].mxu0 %v915
        %v1011 = vpop.f32.mrb[0].mxu0
        %v1012 = vadd.f32 %v813, %v1011
        %v1013 = vpop.f32.mrb[0].mxu0
        %v1014 = vpop.f32.mrb[0].mxu0
        %v1015 = vadd.f32 %v816, %v1014
        %v1016 = vpop.f32.mrb[0].mxu0
        %1017 = vmatprep.mubr.bf16.mxu0 0
        %1018 = vmatmul.mubr.bf16.gmra.mrb[0].mxu0 %v917
        %v1019 = vpop.f32.mrb[0].mxu0
        %v1020 = vadd.f32 %v821, %v1019
        %v1021 = vpop.f32.mrb[0].mxu0
        %v1022 = vpop.f32.mrb[0].mxu0
        %v1023 = vadd.f32 %v824, %v1022
        %v1024 = vpop.f32.mrb[0].mxu0
        %1025 = vmatprep.mubr.bf16.mxu0 0
        %1026 = vmatmul.mubr.bf16.gmra.mrb[0].mxu0 %v919
        %v1027 = vpop.f32.mrb[0].mxu0
        %v1028 = vadd.f32 %v829, %v1027
        %v1029 = vpop.f32.mrb[0].mxu0
        %v1030 = vpop.f32.mrb[0].mxu0
        %v1031 = vadd.f32 %v832, %v1030
        %v1032 = vpop.f32.mrb[0].mxu0
        %1033 = vmatprep.mubr.bf16.mxu0 0
        %1034 = vmatmul.mubr.bf16.gmra.mrb[0].mxu0 %v921
        %v1035 = vpop.f32.mrb[0].mxu0
        %v1036 = vadd.f32 %v837, %v1035
        %v1037 = vpop.f32.mrb[0].mxu0
        %v1038 = vpop.f32.mrb[0].mxu0
        %v1039 = vadd.f32 %v840, %v1038
        %v1040 = vpop.f32.mrb[0].mxu0
        %1041 = vmatprep.mubr.bf16.mxu0 0
        %1042 = vmatmul.mubr.bf16.gmra.mrb[0].mxu0 %v923
        %v1043 = vpop.f32.mrb[0].mxu0
        %v1044 = vadd.f32 %v845, %v1043
        %v1045 = vpop.f32.mrb[0].mxu0
        %v1046 = vpop.f32.mrb[0].mxu0
        %v1047 = vadd.f32 %v848, %v1046
        %v1048 = vpop.f32.mrb[0].mxu0
        %1049 = vmatprep.mubr.bf16.mxu0 0
        %1050 = vmatmul.mubr.bf16.gmra.mrb[0].mxu0 %v925
        %v1051 = vpop.f32.mrb[0].mxu0
        %v1052 = vadd.f32 %v853, %v1051
        %v1053 = vpop.f32.mrb[0].mxu0
        %v1054 = vpop.f32.mrb[0].mxu0
        %v1055 = vadd.f32 %v856, %v1054
        %v1056 = vpop.f32.mrb[0].mxu0
        %1057 = vmatprep.mubr.bf16.mxu0 0
        %1058 = vmatmul.mubr.bf16.gmra.mrb[0].mxu0 %v927
        %v1059 = vpop.f32.mrb[0].mxu0
        %v1060 = vadd.f32 %v861, %v1059
        %v1061 = vpop.f32.mrb[0].mxu0
        %v1062 = vpop.f32.mrb[0].mxu0
        %v1063 = vadd.f32 %v864, %v1062
        %v1064 = vpop.f32.mrb[0].mxu0
        %1065 = vmatprep.mubr.bf16.mxu0 0
        %1066 = vmatmul.mubr.bf16.gmra.mrb[0].mxu0 %v929
        %v1067 = vpop.f32.mrb[0].mxu0
        %v1068 = vadd.f32 %v869, %v1067
        %v1069 = vpop.f32.mrb[0].mxu0
        %v1070 = vpop.f32.mrb[0].mxu0
        %v1071 = vadd.f32 %v872, %v1070
        %v1072 = vpop.f32.mrb[0].mxu0
        %1073 = vmatprep.mubr.bf16.mxu0 0
        %1074 = vmatmul.mubr.bf16.gmra.mrb[0].mxu0 %v931
        %v1075 = vpop.f32.mrb[0].mxu0
        %v1076 = vadd.f32 %v877, %v1075
        %v1077 = vpop.f32.mrb[0].mxu0
        %v1078 = vpop.f32.mrb[0].mxu0
        %v1079 = vadd.f32 %v880, %v1078
        %v1080 = vpop.f32.mrb[0].mxu0
        %1081 = vmatprep.mubr.bf16.mxu0 0
        %1082 = vmatmul.mubr.bf16.gmra.mrb[0].mxu0 %v933
        %v1083 = vpop.f32.mrb[0].mxu0
        %v1084 = vadd.f32 %v885, %v1083
        %v1085 = vpop.f32.mrb[0].mxu0
        %v1086 = vpop.f32.mrb[0].mxu0
        %v1087 = vadd.f32 %v888, %v1086
        %v1088 = vpop.f32.mrb[0].mxu0
        %1089 = vmatprep.mubr.bf16.mxu0 0
        %1090 = vmatmul.mubr.bf16.gmra.mrb[0].mxu0 %v935
        %v1091 = vpop.f32.mrb[0].mxu0
        %v1092 = vadd.f32 %v893, %v1091
        %v1093 = vpop.f32.mrb[0].mxu0
        %v1094 = vpop.f32.mrb[0].mxu0
        %v1095 = vadd.f32 %v896, %v1094
        %v1096 = vpop.f32.mrb[0].mxu0
        %1097 = vdwg.mxu0
        %vm1114 = vcmask 1046528
        %v1115 = vrot.slane %v498, 1
        %v1116 = vrot.slane %v340, 1
        %v1117 = vsel %vm1114, %v1115, %v1116
        %v1118 = vrot.slane %v508, 1
        %v1119 = vsel %vm1114, %v1116, %v1118
        %v1120 = vrot.slane %v499, 1
        %v1121 = vrot.slane %v355, 1
        %v1122 = vsel %vm1114, %v1120, %v1121
        %v1123 = vrot.slane %v509, 1
        %v1124 = vsel %vm1114, %v1121, %v1123
        %v1125 = vrot.slane %v500, 1
        %v1126 = vrot.slane %v370, 1
        %v1127 = vsel %vm1114, %v1125, %v1126
        %v1128 = vrot.slane %v510, 1
        %v1129 = vsel %vm1114, %v1126, %v1128
        %v1130 = vrot.slane %v501, 1
        %v1131 = vrot.slane %v385, 1
        %v1132 = vsel %vm1114, %v1130, %v1131
        %v1133 = vrot.slane %v511, 1
        %v1134 = vsel %vm1114, %v1131, %v1133
        %v1135 = vrot.slane %v502, 1
        %v1136 = vrot.slane %v400, 1
        %v1137 = vsel %vm1114, %v1135, %v1136
        %v1138 = vrot.slane %v512, 1
        %v1139 = vsel %vm1114, %v1136, %v1138
        %v1140 = vrot.slane %v503, 1
        %v1141 = vrot.slane %v415, 1
        %v1142 = vsel %vm1114, %v1140, %v1141
        %v1143 = vrot.slane %v513, 1
        %v1144 = vsel %vm1114, %v1141, %v1143
        %v1145 = vrot.slane %v504, 1
        %v1146 = vrot.slane %v430, 1
        %v1147 = vsel %vm1114, %v1145, %v1146
        %v1148 = vrot.slane %v514, 1
        %v1149 = vsel %vm1114, %v1146, %v1148
        %v1150 = vrot.slane %v505, 1
        %v1151 = vrot.slane %v445, 1
        %v1152 = vsel %vm1114, %v1150, %v1151
        %v1153 = vrot.slane %v515, 1
        %v1154 = vsel %vm1114, %v1151, %v1153
        %v1155 = vld [vmem:[%s2 + $0x10] sm:$0xf]
        %v1156 = vld [vmem:[%s2 + $0x14] sm:$0xf]
        %v1159 = vunpack.c.l.b16 %v1155
        %v1160 = vunpack.c.l.b16 %v1156
        %v1161 = vpack.c.b16 %v1160, %v1159
        %v1164 = vsel %vm689, %v1117, 0
        %v1167 = vsel %vm689, %v1119, 0
        %v1170 = vsel %vm689, %v1122, 0
        %v1173 = vsel %vm689, %v1124, 0
        %v1176 = vsel %vm689, %v1127, 0
        %v1179 = vsel %vm689, %v1129, 0
        %v1182 = vsel %vm689, %v1132, 0
        %v1185 = vsel %vm689, %v1134, 0
        %v1188 = vsel %vm689, %v1137, 0
        %v1191 = vsel %vm689, %v1139, 0
        %v1194 = vsel %vm689, %v1142, 0
        %v1197 = vsel %vm689, %v1144, 0
        %v1200 = vsel %vm689, %v1147, 0
        %v1203 = vsel %vm689, %v1149, 0
        %v1206 = vsel %vm689, %v1152, 0
        %v1209 = vsel %vm689, %v1154, 0
        %1211 = vmatprep.subr.bf16.mxu0 0
        %1212 = vmatpush1.bf16.msra.mxu0 %v1161
        %1213 = vmatprep.subr.bf16.mxu0 0
        %1214 = vmatpush1.bf16.msra.mxu0 0
        %1215 = vmatprep.subr.bf16.mxu0 0
        %1216 = vmatpush1.bf16.msra.mxu0 0
        %1217 = vmatprep.subr.bf16.mxu0 0
        %1218 = vmatpush1.bf16.msra.mxu0 0
        %1219 = vmatprep.subr.bf16.mxu0 0
        %1220 = vmatpush1.bf16.msra.mxu0 0
        %1221 = vmatprep.subr.bf16.mxu0 0
        %1222 = vmatpush1.bf16.msra.mxu0 0
        %1223 = vmatprep.subr.bf16.mxu0 0
        %1224 = vmatpush1.bf16.msra.mxu0 0
        %1225 = vmatprep.subr.bf16.mxu0 0
        %1226 = vmatpush1.bf16.msra.mxu0 0
        %1227 = vmatprep.subr.bf16.mxu0 0
        %1228 = vmatpush1.bf16.msra.mxu0 0
        %1229 = vmatprep.subr.bf16.mxu0 0
        %1230 = vmatpush1.bf16.msra.mxu0 0
        %1231 = vmatprep.subr.bf16.mxu0 0
        %1232 = vmatpush1.bf16.msra.mxu0 0
        %1233 = vmatprep.subr.bf16.mxu0 0
        %1234 = vmatpush1.bf16.msra.mxu0 0
        %1235 = vmatprep.subr.bf16.mxu0 0
        %1236 = vmatpush1.bf16.msra.mxu0 0
        %1237 = vmatprep.subr.bf16.mxu0 0
        %1238 = vmatpush1.bf16.msra.mxu0 0
        %1239 = vmatprep.subr.bf16.mxu0 0
        %1240 = vmatpush1.bf16.msra.mxu0 0
        %1241 = vmatprep.subr.bf16.mxu0 0
        %1242 = vmatpush1.bf16.msra.mxu0 0
        %1243 = vmatprep.mubr.bf16.mxu0 0
        %1244 = vmatmul.mubr.bf16.gmra.mrb[0].mxu0 %v1164
        %v1245 = vpop.f32.mrb[0].mxu0
        %v1246 = vadd.f32 0.0, %v1245
        %v1247 = vpop.f32.mrb[0].mxu0
        %v1248 = vpop.f32.mrb[0].mxu0
        %v1249 = vadd.f32 0.0, %v1248
        %v1250 = vpop.f32.mrb[0].mxu0
        %1251 = vmatprep.mubr.bf16.mxu0 0
        %1252 = vmatmul.mubr.bf16.gmra.mrb[0].mxu0 %v1167
        %v1253 = vpop.f32.mrb[0].mxu0
        %v1254 = vadd.f32 0.0, %v1253
        %v1255 = vpop.f32.mrb[0].mxu0
        %v1256 = vpop.f32.mrb[0].mxu0
        %v1257 = vadd.f32 0.0, %v1256
        %v1258 = vpop.f32.mrb[0].mxu0
        %1259 = vmatprep.mubr.bf16.mxu0 0
        %1260 = vmatmul.mubr.bf16.gmra.mrb[0].mxu0 %v1170
        %v1261 = vpop.f32.mrb[0].mxu0
        %v1262 = vadd.f32 0.0, %v1261
        %v1263 = vpop.f32.mrb[0].mxu0
        %v1264 = vpop.f32.mrb[0].mxu0
        %v1265 = vadd.f32 0.0, %v1264
        %v1266 = vpop.f32.mrb[0].mxu0
        %1267 = vmatprep.mubr.bf16.mxu0 0
        %1268 = vmatmul.mubr.bf16.gmra.mrb[0].mxu0 %v1173
        %v1269 = vpop.f32.mrb[0].mxu0
        %v1270 = vadd.f32 0.0, %v1269
        %v1271 = vpop.f32.mrb[0].mxu0
        %v1272 = vpop.f32.mrb[0].mxu0
        %v1273 = vadd.f32 0.0, %v1272
        %v1274 = vpop.f32.mrb[0].mxu0
        %1275 = vmatprep.mubr.bf16.mxu0 0
        %1276 = vmatmul.mubr.bf16.gmra.mrb[0].mxu0 %v1176
        %v1277 = vpop.f32.mrb[0].mxu0
        %v1278 = vadd.f32 0.0, %v1277
        %v1279 = vpop.f32.mrb[0].mxu0
        %v1280 = vpop.f32.mrb[0].mxu0
        %v1281 = vadd.f32 0.0, %v1280
        %v1282 = vpop.f32.mrb[0].mxu0
        %1283 = vmatprep.mubr.bf16.mxu0 0
        %1284 = vmatmul.mubr.bf16.gmra.mrb[0].mxu0 %v1179
        %v1285 = vpop.f32.mrb[0].mxu0
        %v1286 = vadd.f32 0.0, %v1285
        %v1287 = vpop.f32.mrb[0].mxu0
        %v1288 = vpop.f32.mrb[0].mxu0
        %v1289 = vadd.f32 0.0, %v1288
        %v1290 = vpop.f32.mrb[0].mxu0
        %1291 = vmatprep.mubr.bf16.mxu0 0
        %1292 = vmatmul.mubr.bf16.gmra.mrb[0].mxu0 %v1182
        %v1293 = vpop.f32.mrb[0].mxu0
        %v1294 = vadd.f32 0.0, %v1293
        %v1295 = vpop.f32.mrb[0].mxu0
        %v1296 = vpop.f32.mrb[0].mxu0
        %v1297 = vadd.f32 0.0, %v1296
        %v1298 = vpop.f32.mrb[0].mxu0
        %1299 = vmatprep.mubr.bf16.mxu0 0
        %1300 = vmatmul.mubr.bf16.gmra.mrb[0].mxu0 %v1185
        %v1301 = vpop.f32.mrb[0].mxu0
        %v1302 = vadd.f32 0.0, %v1301
        %v1303 = vpop.f32.mrb[0].mxu0
        %v1304 = vpop.f32.mrb[0].mxu0
        %v1305 = vadd.f32 0.0, %v1304
        %v1306 = vpop.f32.mrb[0].mxu0
        %1307 = vmatprep.mubr.bf16.mxu0 0
        %1308 = vmatmul.mubr.bf16.gmra.mrb[0].mxu0 %v1188
        %v1309 = vpop.f32.mrb[0].mxu0
        %v1310 = vadd.f32 0.0, %v1309
        %v1311 = vpop.f32.mrb[0].mxu0
        %v1312 = vpop.f32.mrb[0].mxu0
        %v1313 = vadd.f32 0.0, %v1312
        %v1314 = vpop.f32.mrb[0].mxu0
        %1315 = vmatprep.mubr.bf16.mxu0 0
        %1316 = vmatmul.mubr.bf16.gmra.mrb[0].mxu0 %v1191
        %v1317 = vpop.f32.mrb[0].mxu0
        %v1318 = vadd.f32 0.0, %v1317
        %v1319 = vpop.f32.mrb[0].mxu0
        %v1320 = vpop.f32.mrb[0].mxu0
        %v1321 = vadd.f32 0.0, %v1320
        %v1322 = vpop.f32.mrb[0].mxu0
        %1323 = vmatprep.mubr.bf16.mxu0 0
        %1324 = vmatmul.mubr.bf16.gmra.mrb[0].mxu0 %v1194
        %v1325 = vpop.f32.mrb[0].mxu0
        %v1326 = vadd.f32 0.0, %v1325
        %v1327 = vpop.f32.mrb[0].mxu0
        %v1328 = vpop.f32.mrb[0].mxu0
        %v1329 = vadd.f32 0.0, %v1328
        %v1330 = vpop.f32.mrb[0].mxu0
        %1331 = vmatprep.mubr.bf16.mxu0 0
        %1332 = vmatmul.mubr.bf16.gmra.mrb[0].mxu0 %v1197
        %v1333 = vpop.f32.mrb[0].mxu0
        %v1334 = vadd.f32 0.0, %v1333
        %v1335 = vpop.f32.mrb[0].mxu0
        %v1336 = vpop.f32.mrb[0].mxu0
        %v1337 = vadd.f32 0.0, %v1336
        %v1338 = vpop.f32.mrb[0].mxu0
        %1339 = vmatprep.mubr.bf16.mxu0 0
        %1340 = vmatmul.mubr.bf16.gmra.mrb[0].mxu0 %v1200
        %v1341 = vpop.f32.mrb[0].mxu0
        %v1342 = vadd.f32 0.0, %v1341
        %v1343 = vpop.f32.mrb[0].mxu0
        %v1344 = vpop.f32.mrb[0].mxu0
        %v1345 = vadd.f32 0.0, %v1344
        %v1346 = vpop.f32.mrb[0].mxu0
        %1347 = vmatprep.mubr.bf16.mxu0 0
        %1348 = vmatmul.mubr.bf16.gmra.mrb[0].mxu0 %v1203
        %v1349 = vpop.f32.mrb[0].mxu0
        %v1350 = vadd.f32 0.0, %v1349
        %v1351 = vpop.f32.mrb[0].mxu0
        %v1352 = vpop.f32.mrb[0].mxu0
        %v1353 = vadd.f32 0.0, %v1352
        %v1354 = vpop.f32.mrb[0].mxu0
        %1355 = vmatprep.mubr.bf16.mxu0 0
        %1356 = vmatmul.mubr.bf16.gmra.mrb[0].mxu0 %v1206
        %v1357 = vpop.f32.mrb[0].mxu0
        %v1358 = vadd.f32 0.0, %v1357
        %v1359 = vpop.f32.mrb[0].mxu0
        %v1360 = vpop.f32.mrb[0].mxu0
        %v1361 = vadd.f32 0.0, %v1360
        %v1362 = vpop.f32.mrb[0].mxu0
        %1363 = vmatprep.mubr.bf16.mxu0 0
        %1364 = vmatmul.mubr.bf16.gmra.mrb[0].mxu0 %v1209
        %v1365 = vpop.f32.mrb[0].mxu0
        %v1366 = vadd.f32 0.0, %v1365
        %v1367 = vpop.f32.mrb[0].mxu0
        %v1368 = vpop.f32.mrb[0].mxu0
        %v1369 = vadd.f32 0.0, %v1368
        %v1370 = vpop.f32.mrb[0].mxu0
        %1371 = vdwg.mxu0
        %v1372 = vadd.f32 %v972, %v1246
        %v1373 = vadd.f32 %v975, %v1249
        %v1374 = vadd.f32 %v980, %v1254
        %v1375 = vadd.f32 %v983, %v1257
        %v1376 = vadd.f32 %v988, %v1262
        %v1377 = vadd.f32 %v991, %v1265
        %v1378 = vadd.f32 %v996, %v1270
        %v1379 = vadd.f32 %v999, %v1273
        %v1380 = vadd.f32 %v1004, %v1278
        %v1381 = vadd.f32 %v1007, %v1281
        %v1382 = vadd.f32 %v1012, %v1286
        %v1383 = vadd.f32 %v1015, %v1289
        %v1384 = vadd.f32 %v1020, %v1294
        %v1385 = vadd.f32 %v1023, %v1297
        %v1386 = vadd.f32 %v1028, %v1302
        %v1387 = vadd.f32 %v1031, %v1305
        %v1388 = vadd.f32 %v1036, %v1310
        %v1389 = vadd.f32 %v1039, %v1313
        %v1390 = vadd.f32 %v1044, %v1318
        %v1391 = vadd.f32 %v1047, %v1321
        %v1392 = vadd.f32 %v1052, %v1326
        %v1393 = vadd.f32 %v1055, %v1329
        %v1394 = vadd.f32 %v1060, %v1334
        %v1395 = vadd.f32 %v1063, %v1337
        %v1396 = vadd.f32 %v1068, %v1342
        %v1397 = vadd.f32 %v1071, %v1345
        %v1398 = vadd.f32 %v1076, %v1350
        %v1399 = vadd.f32 %v1079, %v1353
        %v1400 = vadd.f32 %v1084, %v1358
        %v1401 = vadd.f32 %v1087, %v1361
        %v1402 = vadd.f32 %v1092, %v1366
        %v1403 = vadd.f32 %v1095, %v1369
        %v1404 = vld [vmem:[%s2 + $0x18] sm:$0xf]
        %v1405 = vld [vmem:[%s2 + $0x1c] sm:$0xf]
        %v1408 = vunpack.c.l.b16 %v1404
        %v1409 = vunpack.c.l.b16 %v1405
        %v1410 = vpack.c.b16 %v1409, %v1408
        %v1413 = vsel %vm689, %v506, 0
        %v1416 = vsel %vm689, %v460, 0
        %1418 = vmatprep.subr.bf16.mxu0 0
        %1419 = vmatpush1.bf16.msra.mxu0 %v1410
        %1420 = vmatprep.subr.bf16.mxu0 0
        %1421 = vmatpush1.bf16.msra.mxu0 0
        %1422 = vmatprep.subr.bf16.mxu0 0
        %1423 = vmatpush1.bf16.msra.mxu0 0
        %1424 = vmatprep.subr.bf16.mxu0 0
        %1425 = vmatpush1.bf16.msra.mxu0 0
        %1426 = vmatprep.subr.bf16.mxu0 0
        %1427 = vmatpush1.bf16.msra.mxu0 0
        %1428 = vmatprep.subr.bf16.mxu0 0
        %1429 = vmatpush1.bf16.msra.mxu0 0
        %1430 = vmatprep.subr.bf16.mxu0 0
        %1431 = vmatpush1.bf16.msra.mxu0 0
        %1432 = vmatprep.subr.bf16.mxu0 0
        %1433 = vmatpush1.bf16.msra.mxu0 0
        %1434 = vmatprep.subr.bf16.mxu0 0
        %1435 = vmatpush1.bf16.msra.mxu0 0
        %1436 = vmatprep.subr.bf16.mxu0 0
        %1437 = vmatpush1.bf16.msra.mxu0 0
        %1438 = vmatprep.subr.bf16.mxu0 0
        %1439 = vmatpush1.bf16.msra.mxu0 0
        %1440 = vmatprep.subr.bf16.mxu0 0
        %1441 = vmatpush1.bf16.msra.mxu0 0
        %1442 = vmatprep.subr.bf16.mxu0 0
        %1443 = vmatpush1.bf16.msra.mxu0 0
        %1444 = vmatprep.subr.bf16.mxu0 0
        %1445 = vmatpush1.bf16.msra.mxu0 0
        %1446 = vmatprep.subr.bf16.mxu0 0
        %1447 = vmatpush1.bf16.msra.mxu0 0
        %1448 = vmatprep.subr.bf16.mxu0 0
        %1449 = vmatpush1.bf16.msra.mxu0 0
        %1450 = vmatprep.mubr.bf16.mxu0 0
        %1451 = vmatmul.mubr.bf16.gmra.mrb[0].mxu0 %v909
        %v1452 = vpop.f32.mrb[0].mxu0
        %v1453 = vadd.f32 0.0, %v1452
        %v1454 = vpop.f32.mrb[0].mxu0
        %v1455 = vpop.f32.mrb[0].mxu0
        %v1456 = vadd.f32 0.0, %v1455
        %v1457 = vpop.f32.mrb[0].mxu0
        %1458 = vmatprep.mubr.bf16.mxu0 0
        %1459 = vmatmul.mubr.bf16.gmra.mrb[0].mxu0 %v911
        %v1460 = vpop.f32.mrb[0].mxu0
        %v1461 = vadd.f32 0.0, %v1460
        %v1462 = vpop.f32.mrb[0].mxu0
        %v1463 = vpop.f32.mrb[0].mxu0
        %v1464 = vadd.f32 0.0, %v1463
        %v1465 = vpop.f32.mrb[0].mxu0
        %1466 = vmatprep.mubr.bf16.mxu0 0
        %1467 = vmatmul.mubr.bf16.gmra.mrb[0].mxu0 %v913
        %v1468 = vpop.f32.mrb[0].mxu0
        %v1469 = vadd.f32 0.0, %v1468
        %v1470 = vpop.f32.mrb[0].mxu0
        %v1471 = vpop.f32.mrb[0].mxu0
        %v1472 = vadd.f32 0.0, %v1471
        %v1473 = vpop.f32.mrb[0].mxu0
        %1474 = vmatprep.mubr.bf16.mxu0 0
        %1475 = vmatmul.mubr.bf16.gmra.mrb[0].mxu0 %v915
        %v1476 = vpop.f32.mrb[0].mxu0
        %v1477 = vadd.f32 0.0, %v1476
        %v1478 = vpop.f32.mrb[0].mxu0
        %v1479 = vpop.f32.mrb[0].mxu0
        %v1480 = vadd.f32 0.0, %v1479
        %v1481 = vpop.f32.mrb[0].mxu0
        %1482 = vmatprep.mubr.bf16.mxu0 0
        %1483 = vmatmul.mubr.bf16.gmra.mrb[0].mxu0 %v917
        %v1484 = vpop.f32.mrb[0].mxu0
        %v1485 = vadd.f32 0.0, %v1484
        %v1486 = vpop.f32.mrb[0].mxu0
        %v1487 = vpop.f32.mrb[0].mxu0
        %v1488 = vadd.f32 0.0, %v1487
        %v1489 = vpop.f32.mrb[0].mxu0
        %1490 = vmatprep.mubr.bf16.mxu0 0
        %1491 = vmatmul.mubr.bf16.gmra.mrb[0].mxu0 %v919
        %v1492 = vpop.f32.mrb[0].mxu0
        %v1493 = vadd.f32 0.0, %v1492
        %v1494 = vpop.f32.mrb[0].mxu0
        %v1495 = vpop.f32.mrb[0].mxu0
        %v1496 = vadd.f32 0.0, %v1495
        %v1497 = vpop.f32.mrb[0].mxu0
        %1498 = vmatprep.mubr.bf16.mxu0 0
        %1499 = vmatmul.mubr.bf16.gmra.mrb[0].mxu0 %v921
        %v1500 = vpop.f32.mrb[0].mxu0
        %v1501 = vadd.f32 0.0, %v1500
        %v1502 = vpop.f32.mrb[0].mxu0
        %v1503 = vpop.f32.mrb[0].mxu0
        %v1504 = vadd.f32 0.0, %v1503
        %v1505 = vpop.f32.mrb[0].mxu0
        %1506 = vmatprep.mubr.bf16.mxu0 0
        %1507 = vmatmul.mubr.bf16.gmra.mrb[0].mxu0 %v923
        %v1508 = vpop.f32.mrb[0].mxu0
        %v1509 = vadd.f32 0.0, %v1508
        %v1510 = vpop.f32.mrb[0].mxu0
        %v1511 = vpop.f32.mrb[0].mxu0
        %v1512 = vadd.f32 0.0, %v1511
        %v1513 = vpop.f32.mrb[0].mxu0
        %1514 = vmatprep.mubr.bf16.mxu0 0
        %1515 = vmatmul.mubr.bf16.gmra.mrb[0].mxu0 %v925
        %v1516 = vpop.f32.mrb[0].mxu0
        %v1517 = vadd.f32 0.0, %v1516
        %v1518 = vpop.f32.mrb[0].mxu0
        %v1519 = vpop.f32.mrb[0].mxu0
        %v1520 = vadd.f32 0.0, %v1519
        %v1521 = vpop.f32.mrb[0].mxu0
        %1522 = vmatprep.mubr.bf16.mxu0 0
        %1523 = vmatmul.mubr.bf16.gmra.mrb[0].mxu0 %v927
        %v1524 = vpop.f32.mrb[0].mxu0
        %v1525 = vadd.f32 0.0, %v1524
        %v1526 = vpop.f32.mrb[0].mxu0
        %v1527 = vpop.f32.mrb[0].mxu0
        %v1528 = vadd.f32 0.0, %v1527
        %v1529 = vpop.f32.mrb[0].mxu0
        %1530 = vmatprep.mubr.bf16.mxu0 0
        %1531 = vmatmul.mubr.bf16.gmra.mrb[0].mxu0 %v929
        %v1532 = vpop.f32.mrb[0].mxu0
        %v1533 = vadd.f32 0.0, %v1532
        %v1534 = vpop.f32.mrb[0].mxu0
        %v1535 = vpop.f32.mrb[0].mxu0
        %v1536 = vadd.f32 0.0, %v1535
        %v1537 = vpop.f32.mrb[0].mxu0
        %1538 = vmatprep.mubr.bf16.mxu0 0
        %1539 = vmatmul.mubr.bf16.gmra.mrb[0].mxu0 %v931
        %v1540 = vpop.f32.mrb[0].mxu0
        %v1541 = vadd.f32 0.0, %v1540
        %v1542 = vpop.f32.mrb[0].mxu0
        %v1543 = vpop.f32.mrb[0].mxu0
        %v1544 = vadd.f32 0.0, %v1543
        %v1545 = vpop.f32.mrb[0].mxu0
        %1546 = vmatprep.mubr.bf16.mxu0 0
        %1547 = vmatmul.mubr.bf16.gmra.mrb[0].mxu0 %v933
        %v1548 = vpop.f32.mrb[0].mxu0
        %v1549 = vadd.f32 0.0, %v1548
        %v1550 = vpop.f32.mrb[0].mxu0
        %v1551 = vpop.f32.mrb[0].mxu0
        %v1552 = vadd.f32 0.0, %v1551
        %v1553 = vpop.f32.mrb[0].mxu0
        %1554 = vmatprep.mubr.bf16.mxu0 0
        %1555 = vmatmul.mubr.bf16.gmra.mrb[0].mxu0 %v935
        %v1556 = vpop.f32.mrb[0].mxu0
        %v1557 = vadd.f32 0.0, %v1556
        %v1558 = vpop.f32.mrb[0].mxu0
        %v1559 = vpop.f32.mrb[0].mxu0
        %v1560 = vadd.f32 0.0, %v1559
        %v1561 = vpop.f32.mrb[0].mxu0
        %1562 = vmatprep.mubr.bf16.mxu0 0
        %1563 = vmatmul.mubr.bf16.gmra.mrb[0].mxu0 %v1413
        %v1564 = vpop.f32.mrb[0].mxu0
        %v1565 = vadd.f32 0.0, %v1564
        %v1566 = vpop.f32.mrb[0].mxu0
        %v1567 = vpop.f32.mrb[0].mxu0
        %v1568 = vadd.f32 0.0, %v1567
        %v1569 = vpop.f32.mrb[0].mxu0
        %1570 = vmatprep.mubr.bf16.mxu0 0
        %1571 = vmatmul.mubr.bf16.gmra.mrb[0].mxu0 %v1416
        %v1572 = vpop.f32.mrb[0].mxu0
        %v1573 = vadd.f32 0.0, %v1572
        %v1574 = vpop.f32.mrb[0].mxu0
        %v1575 = vpop.f32.mrb[0].mxu0
        %v1576 = vadd.f32 0.0, %v1575
        %v1577 = vpop.f32.mrb[0].mxu0
        %1578 = vdwg.mxu0
        %v1579 = vadd.f32 %v1372, %v1453
        %v1580 = vadd.f32 %v1373, %v1456
        %v1581 = vadd.f32 %v1374, %v1461
        %v1582 = vadd.f32 %v1375, %v1464
        %v1583 = vadd.f32 %v1376, %v1469
        %v1584 = vadd.f32 %v1377, %v1472
        %v1585 = vadd.f32 %v1378, %v1477
        %v1586 = vadd.f32 %v1379, %v1480
        %v1587 = vadd.f32 %v1380, %v1485
        %v1588 = vadd.f32 %v1381, %v1488
        %v1589 = vadd.f32 %v1382, %v1493
        %v1590 = vadd.f32 %v1383, %v1496
        %v1591 = vadd.f32 %v1384, %v1501
        %v1592 = vadd.f32 %v1385, %v1504
        %v1593 = vadd.f32 %v1386, %v1509
        %v1594 = vadd.f32 %v1387, %v1512
        %v1595 = vadd.f32 %v1388, %v1517
        %v1596 = vadd.f32 %v1389, %v1520
        %v1597 = vadd.f32 %v1390, %v1525
        %v1598 = vadd.f32 %v1391, %v1528
        %v1599 = vadd.f32 %v1392, %v1533
        %v1600 = vadd.f32 %v1393, %v1536
        %v1601 = vadd.f32 %v1394, %v1541
        %v1602 = vadd.f32 %v1395, %v1544
        %v1603 = vadd.f32 %v1396, %v1549
        %v1604 = vadd.f32 %v1397, %v1552
        %v1605 = vadd.f32 %v1398, %v1557
        %v1606 = vadd.f32 %v1399, %v1560
        %v1607 = vadd.f32 %v1400, %v1565
        %v1608 = vadd.f32 %v1401, %v1568
        %v1609 = vadd.f32 %v1402, %v1573
        %v1610 = vadd.f32 %v1403, %v1576
        %v1611 = vshrl.u32 %v506, 16
        %v1613 = vshll.u32 %v506, 16
        %v1615 = vrot.slane %v1613, 1
        %v1616 = vor.u32 %v1611, %v1615
        %v1617 = vshll.u32 %v460, 16
        %v1619 = vrot.slane %v1617, 1
        %v1620 = vsel %vm520, %v1616, %v1619
        %v1621 = vshrl.u32 %v460, 16
        %v1623 = vor.u32 %v1621, %v1619
        %v1625 = vshll.u32 %v516, 16
        %v1627 = vrot.slane %v1625, 1
        %v1628 = vsel %vm520, %v1623, %v1627
        %v1629 = vld [vmem:[%s2 + $0x20] sm:$0xf]
        %v1630 = vld [vmem:[%s2 + $0x24] sm:$0xf]
        %v1633 = vunpack.c.l.b16 %v1629
        %v1634 = vunpack.c.l.b16 %v1630
        %v1635 = vpack.c.b16 %v1634, %v1633
        %v1638 = vsel %vm689, %v1620, 0
        %v1641 = vsel %vm689, %v1628, 0
        %1643 = vmatprep.subr.bf16.mxu0 0
        %1644 = vmatpush1.bf16.msra.mxu0 %v1635
        %1645 = vmatprep.subr.bf16.mxu0 0
        %1646 = vmatpush1.bf16.msra.mxu0 0
        %1647 = vmatprep.subr.bf16.mxu0 0
        %1648 = vmatpush1.bf16.msra.mxu0 0
        %1649 = vmatprep.subr.bf16.mxu0 0
        %1650 = vmatpush1.bf16.msra.mxu0 0
        %1651 = vmatprep.subr.bf16.mxu0 0
        %1652 = vmatpush1.bf16.msra.mxu0 0
        %1653 = vmatprep.subr.bf16.mxu0 0
        %1654 = vmatpush1.bf16.msra.mxu0 0
        %1655 = vmatprep.subr.bf16.mxu0 0
        %1656 = vmatpush1.bf16.msra.mxu0 0
        %1657 = vmatprep.subr.bf16.mxu0 0
        %1658 = vmatpush1.bf16.msra.mxu0 0
        %1659 = vmatprep.subr.bf16.mxu0 0
        %1660 = vmatpush1.bf16.msra.mxu0 0
        %1661 = vmatprep.subr.bf16.mxu0 0
        %1662 = vmatpush1.bf16.msra.mxu0 0
        %1663 = vmatprep.subr.bf16.mxu0 0
        %1664 = vmatpush1.bf16.msra.mxu0 0
        %1665 = vmatprep.subr.bf16.mxu0 0
        %1666 = vmatpush1.bf16.msra.mxu0 0
        %1667 = vmatprep.subr.bf16.mxu0 0
        %1668 = vmatpush1.bf16.msra.mxu0 0
        %1669 = vmatprep.subr.bf16.mxu0 0
        %1670 = vmatpush1.bf16.msra.mxu0 0
        %1671 = vmatprep.subr.bf16.mxu0 0
        %1672 = vmatpush1.bf16.msra.mxu0 0
        %1673 = vmatprep.subr.bf16.mxu0 0
        %1674 = vmatpush1.bf16.msra.mxu0 0
        %1675 = vmatprep.mubr.bf16.mxu0 0
        %1676 = vmatmul.mubr.bf16.gmra.mrb[0].mxu0 %v697
        %v1677 = vpop.f32.mrb[0].mxu0
        %v1678 = vadd.f32 0.0, %v1677
        %v1679 = vpop.f32.mrb[0].mxu0
        %v1680 = vpop.f32.mrb[0].mxu0
        %v1681 = vadd.f32 0.0, %v1680
        %v1682 = vpop.f32.mrb[0].mxu0
        %1683 = vmatprep.mubr.bf16.mxu0 0
        %1684 = vmatmul.mubr.bf16.gmra.mrb[0].mxu0 %v700
        %v1685 = vpop.f32.mrb[0].mxu0
        %v1686 = vadd.f32 0.0, %v1685
        %v1687 = vpop.f32.mrb[0].mxu0
        %v1688 = vpop.f32.mrb[0].mxu0
        %v1689 = vadd.f32 0.0, %v1688
        %v1690 = vpop.f32.mrb[0].mxu0
        %1691 = vmatprep.mubr.bf16.mxu0 0
        %1692 = vmatmul.mubr.bf16.gmra.mrb[0].mxu0 %v703
        %v1693 = vpop.f32.mrb[0].mxu0
        %v1694 = vadd.f32 0.0, %v1693
        %v1695 = vpop.f32.mrb[0].mxu0
        %v1696 = vpop.f32.mrb[0].mxu0
        %v1697 = vadd.f32 0.0, %v1696
        %v1698 = vpop.f32.mrb[0].mxu0
        %1699 = vmatprep.mubr.bf16.mxu0 0
        %1700 = vmatmul.mubr.bf16.gmra.mrb[0].mxu0 %v706
        %v1701 = vpop.f32.mrb[0].mxu0
        %v1702 = vadd.f32 0.0, %v1701
        %v1703 = vpop.f32.mrb[0].mxu0
        %v1704 = vpop.f32.mrb[0].mxu0
        %v1705 = vadd.f32 0.0, %v1704
        %v1706 = vpop.f32.mrb[0].mxu0
        %1707 = vmatprep.mubr.bf16.mxu0 0
        %1708 = vmatmul.mubr.bf16.gmra.mrb[0].mxu0 %v709
        %v1709 = vpop.f32.mrb[0].mxu0
        %v1710 = vadd.f32 0.0, %v1709
        %v1711 = vpop.f32.mrb[0].mxu0
        %v1712 = vpop.f32.mrb[0].mxu0
        %v1713 = vadd.f32 0.0, %v1712
        %v1714 = vpop.f32.mrb[0].mxu0
        %1715 = vmatprep.mubr.bf16.mxu0 0
        %1716 = vmatmul.mubr.bf16.gmra.mrb[0].mxu0 %v712
        %v1717 = vpop.f32.mrb[0].mxu0
        %v1718 = vadd.f32 0.0, %v1717
        %v1719 = vpop.f32.mrb[0].mxu0
        %v1720 = vpop.f32.mrb[0].mxu0
        %v1721 = vadd.f32 0.0, %v1720
        %v1722 = vpop.f32.mrb[0].mxu0
        %1723 = vmatprep.mubr.bf16.mxu0 0
        %1724 = vmatmul.mubr.bf16.gmra.mrb[0].mxu0 %v715
        %v1725 = vpop.f32.mrb[0].mxu0
        %v1726 = vadd.f32 0.0, %v1725
        %v1727 = vpop.f32.mrb[0].mxu0
        %v1728 = vpop.f32.mrb[0].mxu0
        %v1729 = vadd.f32 0.0, %v1728
        %v1730 = vpop.f32.mrb[0].mxu0
        %1731 = vmatprep.mubr.bf16.mxu0 0
        %1732 = vmatmul.mubr.bf16.gmra.mrb[0].mxu0 %v718
        %v1733 = vpop.f32.mrb[0].mxu0
        %v1734 = vadd.f32 0.0, %v1733
        %v1735 = vpop.f32.mrb[0].mxu0
        %v1736 = vpop.f32.mrb[0].mxu0
        %v1737 = vadd.f32 0.0, %v1736
        %v1738 = vpop.f32.mrb[0].mxu0
        %1739 = vmatprep.mubr.bf16.mxu0 0
        %1740 = vmatmul.mubr.bf16.gmra.mrb[0].mxu0 %v721
        %v1741 = vpop.f32.mrb[0].mxu0
        %v1742 = vadd.f32 0.0, %v1741
        %v1743 = vpop.f32.mrb[0].mxu0
        %v1744 = vpop.f32.mrb[0].mxu0
        %v1745 = vadd.f32 0.0, %v1744
        %v1746 = vpop.f32.mrb[0].mxu0
        %1747 = vmatprep.mubr.bf16.mxu0 0
        %1748 = vmatmul.mubr.bf16.gmra.mrb[0].mxu0 %v724
        %v1749 = vpop.f32.mrb[0].mxu0
        %v1750 = vadd.f32 0.0, %v1749
        %v1751 = vpop.f32.mrb[0].mxu0
        %v1752 = vpop.f32.mrb[0].mxu0
        %v1753 = vadd.f32 0.0, %v1752
        %v1754 = vpop.f32.mrb[0].mxu0
        %1755 = vmatprep.mubr.bf16.mxu0 0
        %1756 = vmatmul.mubr.bf16.gmra.mrb[0].mxu0 %v727
        %v1757 = vpop.f32.mrb[0].mxu0
        %v1758 = vadd.f32 0.0, %v1757
        %v1759 = vpop.f32.mrb[0].mxu0
        %v1760 = vpop.f32.mrb[0].mxu0
        %v1761 = vadd.f32 0.0, %v1760
        %v1762 = vpop.f32.mrb[0].mxu0
        %1763 = vmatprep.mubr.bf16.mxu0 0
        %1764 = vmatmul.mubr.bf16.gmra.mrb[0].mxu0 %v730
        %v1765 = vpop.f32.mrb[0].mxu0
        %v1766 = vadd.f32 0.0, %v1765
        %v1767 = vpop.f32.mrb[0].mxu0
        %v1768 = vpop.f32.mrb[0].mxu0
        %v1769 = vadd.f32 0.0, %v1768
        %v1770 = vpop.f32.mrb[0].mxu0
        %1771 = vmatprep.mubr.bf16.mxu0 0
        %1772 = vmatmul.mubr.bf16.gmra.mrb[0].mxu0 %v733
        %v1773 = vpop.f32.mrb[0].mxu0
        %v1774 = vadd.f32 0.0, %v1773
        %v1775 = vpop.f32.mrb[0].mxu0
        %v1776 = vpop.f32.mrb[0].mxu0
        %v1777 = vadd.f32 0.0, %v1776
        %v1778 = vpop.f32.mrb[0].mxu0
        %1779 = vmatprep.mubr.bf16.mxu0 0
        %1780 = vmatmul.mubr.bf16.gmra.mrb[0].mxu0 %v736
        %v1781 = vpop.f32.mrb[0].mxu0
        %v1782 = vadd.f32 0.0, %v1781
        %v1783 = vpop.f32.mrb[0].mxu0
        %v1784 = vpop.f32.mrb[0].mxu0
        %v1785 = vadd.f32 0.0, %v1784
        %v1786 = vpop.f32.mrb[0].mxu0
        %1787 = vmatprep.mubr.bf16.mxu0 0
        %1788 = vmatmul.mubr.bf16.gmra.mrb[0].mxu0 %v1638
        %v1789 = vpop.f32.mrb[0].mxu0
        %v1790 = vadd.f32 0.0, %v1789
        %v1791 = vpop.f32.mrb[0].mxu0
        %v1792 = vpop.f32.mrb[0].mxu0
        %v1793 = vadd.f32 0.0, %v1792
        %v1794 = vpop.f32.mrb[0].mxu0
        %1795 = vmatprep.mubr.bf16.mxu0 0
        %1796 = vmatmul.mubr.bf16.gmra.mrb[0].mxu0 %v1641
        %v1797 = vpop.f32.mrb[0].mxu0
        %v1798 = vadd.f32 0.0, %v1797
        %v1799 = vpop.f32.mrb[0].mxu0
        %v1800 = vpop.f32.mrb[0].mxu0
        %v1801 = vadd.f32 0.0, %v1800
        %v1802 = vpop.f32.mrb[0].mxu0
        %1803 = vdwg.mxu0
        %v1804 = vadd.f32 %v1579, %v1678
        %v1805 = vadd.f32 %v1580, %v1681
        %v1806 = vadd.f32 %v1581, %v1686
        %v1807 = vadd.f32 %v1582, %v1689
        %v1808 = vadd.f32 %v1583, %v1694
        %v1809 = vadd.f32 %v1584, %v1697
        %v1810 = vadd.f32 %v1585, %v1702
        %v1811 = vadd.f32 %v1586, %v1705
        %v1812 = vadd.f32 %v1587, %v1710
        %v1813 = vadd.f32 %v1588, %v1713
        %v1814 = vadd.f32 %v1589, %v1718
        %v1815 = vadd.f32 %v1590, %v1721
        %v1816 = vadd.f32 %v1591, %v1726
        %v1817 = vadd.f32 %v1592, %v1729
        %v1818 = vadd.f32 %v1593, %v1734
        %v1819 = vadd.f32 %v1594, %v1737
        %v1820 = vadd.f32 %v1595, %v1742
        %v1821 = vadd.f32 %v1596, %v1745
        %v1822 = vadd.f32 %v1597, %v1750
        %v1823 = vadd.f32 %v1598, %v1753
        %v1824 = vadd.f32 %v1599, %v1758
        %v1825 = vadd.f32 %v1600, %v1761
        %v1826 = vadd.f32 %v1601, %v1766
        %v1827 = vadd.f32 %v1602, %v1769
        %v1828 = vadd.f32 %v1603, %v1774
        %v1829 = vadd.f32 %v1604, %v1777
        %v1830 = vadd.f32 %v1605, %v1782
        %v1831 = vadd.f32 %v1606, %v1785
        %v1832 = vadd.f32 %v1607, %v1790
        %v1833 = vadd.f32 %v1608, %v1793
        %v1834 = vadd.f32 %v1609, %v1798
        %v1835 = vadd.f32 %v1610, %v1801
        %v1838 = vrot.slane %v506, 1
        %v1839 = vrot.slane %v460, 1
        %v1840 = vsel %vm1114, %v1838, %v1839
        %v1841 = vrot.slane %v516, 1
        %v1842 = vsel %vm1114, %v1839, %v1841
        %v1843 = vld [vmem:[%s2 + $0x28] sm:$0xf]
        %v1844 = vld [vmem:[%s2 + $0x2c] sm:$0xf]
        %v1847 = vunpack.c.l.b16 %v1843
        %v1848 = vunpack.c.l.b16 %v1844
        %v1849 = vpack.c.b16 %v1848, %v1847
        %v1852 = vsel %vm689, %v1840, 0
        %v1855 = vsel %vm689, %v1842, 0
        %1857 = vmatprep.subr.bf16.mxu0 0
        %1858 = vmatpush1.bf16.msra.mxu0 %v1849
        %1859 = vmatprep.subr.bf16.mxu0 0
        %1860 = vmatpush1.bf16.msra.mxu0 0
        %1861 = vmatprep.subr.bf16.mxu0 0
        %1862 = vmatpush1.bf16.msra.mxu0 0
        %1863 = vmatprep.subr.bf16.mxu0 0
        %1864 = vmatpush1.bf16.msra.mxu0 0
        %1865 = vmatprep.subr.bf16.mxu0 0
        %1866 = vmatpush1.bf16.msra.mxu0 0
        %1867 = vmatprep.subr.bf16.mxu0 0
        %1868 = vmatpush1.bf16.msra.mxu0 0
        %1869 = vmatprep.subr.bf16.mxu0 0
        %1870 = vmatpush1.bf16.msra.mxu0 0
        %1871 = vmatprep.subr.bf16.mxu0 0
        %1872 = vmatpush1.bf16.msra.mxu0 0
        %1873 = vmatprep.subr.bf16.mxu0 0
        %1874 = vmatpush1.bf16.msra.mxu0 0
        %1875 = vmatprep.subr.bf16.mxu0 0
        %1876 = vmatpush1.bf16.msra.mxu0 0
        %1877 = vmatprep.subr.bf16.mxu0 0
        %1878 = vmatpush1.bf16.msra.mxu0 0
        %1879 = vmatprep.subr.bf16.mxu0 0
        %1880 = vmatpush1.bf16.msra.mxu0 0
        %1881 = vmatprep.subr.bf16.mxu0 0
        %1882 = vmatpush1.bf16.msra.mxu0 0
        %1883 = vmatprep.subr.bf16.mxu0 0
        %1884 = vmatpush1.bf16.msra.mxu0 0
        %1885 = vmatprep.subr.bf16.mxu0 0
        %1886 = vmatpush1.bf16.msra.mxu0 0
        %1887 = vmatprep.subr.bf16.mxu0 0
        %1888 = vmatpush1.bf16.msra.mxu0 0
        %1889 = vmatprep.mubr.bf16.mxu0 0
        %1890 = vmatmul.mubr.bf16.gmra.mrb[0].mxu0 %v1170
        %v1891 = vpop.f32.mrb[0].mxu0
        %v1892 = vadd.f32 0.0, %v1891
        %v1893 = vpop.f32.mrb[0].mxu0
        %v1894 = vpop.f32.mrb[0].mxu0
        %v1895 = vadd.f32 0.0, %v1894
        %v1896 = vpop.f32.mrb[0].mxu0
        %1897 = vmatprep.mubr.bf16.mxu0 0
        %1898 = vmatmul.mubr.bf16.gmra.mrb[0].mxu0 %v1173
        %v1899 = vpop.f32.mrb[0].mxu0
        %v1900 = vadd.f32 0.0, %v1899
        %v1901 = vpop.f32.mrb[0].mxu0
        %v1902 = vpop.f32.mrb[0].mxu0
        %v1903 = vadd.f32 0.0, %v1902
        %v1904 = vpop.f32.mrb[0].mxu0
        %1905 = vmatprep.mubr.bf16.mxu0 0
        %1906 = vmatmul.mubr.bf16.gmra.mrb[0].mxu0 %v1176
        %v1907 = vpop.f32.mrb[0].mxu0
        %v1908 = vadd.f32 0.0, %v1907
        %v1909 = vpop.f32.mrb[0].mxu0
        %v1910 = vpop.f32.mrb[0].mxu0
        %v1911 = vadd.f32 0.0, %v1910
        %v1912 = vpop.f32.mrb[0].mxu0
        %1913 = vmatprep.mubr.bf16.mxu0 0
        %1914 = vmatmul.mubr.bf16.gmra.mrb[0].mxu0 %v1179
        %v1915 = vpop.f32.mrb[0].mxu0
        %v1916 = vadd.f32 0.0, %v1915
        %v1917 = vpop.f32.mrb[0].mxu0
        %v1918 = vpop.f32.mrb[0].mxu0
        %v1919 = vadd.f32 0.0, %v1918
        %v1920 = vpop.f32.mrb[0].mxu0
        %1921 = vmatprep.mubr.bf16.mxu0 0
        %1922 = vmatmul.mubr.bf16.gmra.mrb[0].mxu0 %v1182
        %v1923 = vpop.f32.mrb[0].mxu0
        %v1924 = vadd.f32 0.0, %v1923
        %v1925 = vpop.f32.mrb[0].mxu0
        %v1926 = vpop.f32.mrb[0].mxu0
        %v1927 = vadd.f32 0.0, %v1926
        %v1928 = vpop.f32.mrb[0].mxu0
        %1929 = vmatprep.mubr.bf16.mxu0 0
        %1930 = vmatmul.mubr.bf16.gmra.mrb[0].mxu0 %v1185
        %v1931 = vpop.f32.mrb[0].mxu0
        %v1932 = vadd.f32 0.0, %v1931
        %v1933 = vpop.f32.mrb[0].mxu0
        %v1934 = vpop.f32.mrb[0].mxu0
        %v1935 = vadd.f32 0.0, %v1934
        %v1936 = vpop.f32.mrb[0].mxu0
        %1937 = vmatprep.mubr.bf16.mxu0 0
        %1938 = vmatmul.mubr.bf16.gmra.mrb[0].mxu0 %v1188
        %v1939 = vpop.f32.mrb[0].mxu0
        %v1940 = vadd.f32 0.0, %v1939
        %v1941 = vpop.f32.mrb[0].mxu0
        %v1942 = vpop.f32.mrb[0].mxu0
        %v1943 = vadd.f32 0.0, %v1942
        %v1944 = vpop.f32.mrb[0].mxu0
        %1945 = vmatprep.mubr.bf16.mxu0 0
        %1946 = vmatmul.mubr.bf16.gmra.mrb[0].mxu0 %v1191
        %v1947 = vpop.f32.mrb[0].mxu0
        %v1948 = vadd.f32 0.0, %v1947
        %v1949 = vpop.f32.mrb[0].mxu0
        %v1950 = vpop.f32.mrb[0].mxu0
        %v1951 = vadd.f32 0.0, %v1950
        %v1952 = vpop.f32.mrb[0].mxu0
        %1953 = vmatprep.mubr.bf16.mxu0 0
        %1954 = vmatmul.mubr.bf16.gmra.mrb[0].mxu0 %v1194
        %v1955 = vpop.f32.mrb[0].mxu0
        %v1956 = vadd.f32 0.0, %v1955
        %v1957 = vpop.f32.mrb[0].mxu0
        %v1958 = vpop.f32.mrb[0].mxu0
        %v1959 = vadd.f32 0.0, %v1958
        %v1960 = vpop.f32.mrb[0].mxu0
        %1961 = vmatprep.mubr.bf16.mxu0 0
        %1962 = vmatmul.mubr.bf16.gmra.mrb[0].mxu0 %v1197
        %v1963 = vpop.f32.mrb[0].mxu0
        %v1964 = vadd.f32 0.0, %v1963
        %v1965 = vpop.f32.mrb[0].mxu0
        %v1966 = vpop.f32.mrb[0].mxu0
        %v1967 = vadd.f32 0.0, %v1966
        %v1968 = vpop.f32.mrb[0].mxu0
        %1969 = vmatprep.mubr.bf16.mxu0 0
        %1970 = vmatmul.mubr.bf16.gmra.mrb[0].mxu0 %v1200
        %v1971 = vpop.f32.mrb[0].mxu0
        %v1972 = vadd.f32 0.0, %v1971
        %v1973 = vpop.f32.mrb[0].mxu0
        %v1974 = vpop.f32.mrb[0].mxu0
        %v1975 = vadd.f32 0.0, %v1974
        %v1976 = vpop.f32.mrb[0].mxu0
        %1977 = vmatprep.mubr.bf16.mxu0 0
        %1978 = vmatmul.mubr.bf16.gmra.mrb[0].mxu0 %v1203
        %v1979 = vpop.f32.mrb[0].mxu0
        %v1980 = vadd.f32 0.0, %v1979
        %v1981 = vpop.f32.mrb[0].mxu0
        %v1982 = vpop.f32.mrb[0].mxu0
        %v1983 = vadd.f32 0.0, %v1982
        %v1984 = vpop.f32.mrb[0].mxu0
        %1985 = vmatprep.mubr.bf16.mxu0 0
        %1986 = vmatmul.mubr.bf16.gmra.mrb[0].mxu0 %v1206
        %v1987 = vpop.f32.mrb[0].mxu0
        %v1988 = vadd.f32 0.0, %v1987
        %v1989 = vpop.f32.mrb[0].mxu0
        %v1990 = vpop.f32.mrb[0].mxu0
        %v1991 = vadd.f32 0.0, %v1990
        %v1992 = vpop.f32.mrb[0].mxu0
        %1993 = vmatprep.mubr.bf16.mxu0 0
        %1994 = vmatmul.mubr.bf16.gmra.mrb[0].mxu0 %v1209
        %v1995 = vpop.f32.mrb[0].mxu0
        %v1996 = vadd.f32 0.0, %v1995
        %v1997 = vpop.f32.mrb[0].mxu0
        %v1998 = vpop.f32.mrb[0].mxu0
        %v1999 = vadd.f32 0.0, %v1998
        %v2000 = vpop.f32.mrb[0].mxu0
        %2001 = vmatprep.mubr.bf16.mxu0 0
        %2002 = vmatmul.mubr.bf16.gmra.mrb[0].mxu0 %v1852
        %v2003 = vpop.f32.mrb[0].mxu0
        %v2004 = vadd.f32 0.0, %v2003
        %v2005 = vpop.f32.mrb[0].mxu0
        %v2006 = vpop.f32.mrb[0].mxu0
        %v2007 = vadd.f32 0.0, %v2006
        %v2008 = vpop.f32.mrb[0].mxu0
        %2009 = vmatprep.mubr.bf16.mxu0 0
        %2010 = vmatmul.mubr.bf16.gmra.mrb[0].mxu0 %v1855
        %v2011 = vpop.f32.mrb[0].mxu0
        %v2012 = vadd.f32 0.0, %v2011
        %v2013 = vpop.f32.mrb[0].mxu0
        %v2014 = vpop.f32.mrb[0].mxu0
        %v2015 = vadd.f32 0.0, %v2014
        %v2016 = vpop.f32.mrb[0].mxu0
        %2017 = vdwg.mxu0
        %v2018 = vadd.f32 %v1804, %v1892
        %v2019 = vadd.f32 %v1805, %v1895
        %v2020 = vadd.f32 %v1806, %v1900
        %v2021 = vadd.f32 %v1807, %v1903
        %v2022 = vadd.f32 %v1808, %v1908
        %v2023 = vadd.f32 %v1809, %v1911
        %v2024 = vadd.f32 %v1810, %v1916
        %v2025 = vadd.f32 %v1811, %v1919
        %v2026 = vadd.f32 %v1812, %v1924
        %v2027 = vadd.f32 %v1813, %v1927
        %v2028 = vadd.f32 %v1814, %v1932
        %v2029 = vadd.f32 %v1815, %v1935
        %v2030 = vadd.f32 %v1816, %v1940
        %v2031 = vadd.f32 %v1817, %v1943
        %v2032 = vadd.f32 %v1818, %v1948
        %v2033 = vadd.f32 %v1819, %v1951
        %v2034 = vadd.f32 %v1820, %v1956
        %v2035 = vadd.f32 %v1821, %v1959
        %v2036 = vadd.f32 %v1822, %v1964
        %v2037 = vadd.f32 %v1823, %v1967
        %v2038 = vadd.f32 %v1824, %v1972
        %v2039 = vadd.f32 %v1825, %v1975
        %v2040 = vadd.f32 %v1826, %v1980
        %v2041 = vadd.f32 %v1827, %v1983
        %v2042 = vadd.f32 %v1828, %v1988
        %v2043 = vadd.f32 %v1829, %v1991
        %v2044 = vadd.f32 %v1830, %v1996
        %v2045 = vadd.f32 %v1831, %v1999
        %v2046 = vadd.f32 %v1832, %v2004
        %v2047 = vadd.f32 %v1833, %v2007
        %v2048 = vadd.f32 %v1834, %v2012
        %v2049 = vadd.f32 %v1835, %v2015
        %v2050 = vld [vmem:[%s2 + $0x30] sm:$0xf]
        %v2051 = vld [vmem:[%s2 + $0x34] sm:$0xf]
        %v2054 = vunpack.c.l.b16 %v2050
        %v2055 = vunpack.c.l.b16 %v2051
        %v2056 = vpack.c.b16 %v2055, %v2054
        %v2059 = vsel %vm689, %v507, 0
        %v2062 = vsel %vm689, %v475, 0
        %2064 = vmatprep.subr.bf16.mxu0 0
        %2065 = vmatpush1.bf16.msra.mxu0 %v2056
        %2066 = vmatprep.subr.bf16.mxu0 0
        %2067 = vmatpush1.bf16.msra.mxu0 0
        %2068 = vmatprep.subr.bf16.mxu0 0
        %2069 = vmatpush1.bf16.msra.mxu0 0
        %2070 = vmatprep.subr.bf16.mxu0 0
        %2071 = vmatpush1.bf16.msra.mxu0 0
        %2072 = vmatprep.subr.bf16.mxu0 0
        %2073 = vmatpush1.bf16.msra.mxu0 0
        %2074 = vmatprep.subr.bf16.mxu0 0
        %2075 = vmatpush1.bf16.msra.mxu0 0
        %2076 = vmatprep.subr.bf16.mxu0 0
        %2077 = vmatpush1.bf16.msra.mxu0 0
        %2078 = vmatprep.subr.bf16.mxu0 0
        %2079 = vmatpush1.bf16.msra.mxu0 0
        %2080 = vmatprep.subr.bf16.mxu0 0
        %2081 = vmatpush1.bf16.msra.mxu0 0
        %2082 = vmatprep.subr.bf16.mxu0 0
        %2083 = vmatpush1.bf16.msra.mxu0 0
        %2084 = vmatprep.subr.bf16.mxu0 0
        %2085 = vmatpush1.bf16.msra.mxu0 0
        %2086 = vmatprep.subr.bf16.mxu0 0
        %2087 = vmatpush1.bf16.msra.mxu0 0
        %2088 = vmatprep.subr.bf16.mxu0 0
        %2089 = vmatpush1.bf16.msra.mxu0 0
        %2090 = vmatprep.subr.bf16.mxu0 0
        %2091 = vmatpush1.bf16.msra.mxu0 0
        %2092 = vmatprep.subr.bf16.mxu0 0
        %2093 = vmatpush1.bf16.msra.mxu0 0
        %2094 = vmatprep.subr.bf16.mxu0 0
        %2095 = vmatpush1.bf16.msra.mxu0 0
        %2096 = vmatprep.mubr.bf16.mxu0 0
        %2097 = vmatmul.mubr.bf16.gmra.mrb[0].mxu0 %v913
        %v2098 = vpop.f32.mrb[0].mxu0
        %v2099 = vadd.f32 0.0, %v2098
        %v2100 = vpop.f32.mrb[0].mxu0
        %v2101 = vpop.f32.mrb[0].mxu0
        %v2102 = vadd.f32 0.0, %v2101
        %v2103 = vpop.f32.mrb[0].mxu0
        %2104 = vmatprep.mubr.bf16.mxu0 0
        %2105 = vmatmul.mubr.bf16.gmra.mrb[0].mxu0 %v915
        %v2106 = vpop.f32.mrb[0].mxu0
        %v2107 = vadd.f32 0.0, %v2106
        %v2108 = vpop.f32.mrb[0].mxu0
        %v2109 = vpop.f32.mrb[0].mxu0
        %v2110 = vadd.f32 0.0, %v2109
        %v2111 = vpop.f32.mrb[0].mxu0
        %2112 = vmatprep.mubr.bf16.mxu0 0
        %2113 = vmatmul.mubr.bf16.gmra.mrb[0].mxu0 %v917
        %v2114 = vpop.f32.mrb[0].mxu0
        %v2115 = vadd.f32 0.0, %v2114
        %v2116 = vpop.f32.mrb[0].mxu0
        %v2117 = vpop.f32.mrb[0].mxu0
        %v2118 = vadd.f32 0.0, %v2117
        %v2119 = vpop.f32.mrb[0].mxu0
        %2120 = vmatprep.mubr.bf16.mxu0 0
        %2121 = vmatmul.mubr.bf16.gmra.mrb[0].mxu0 %v919
        %v2122 = vpop.f32.mrb[0].mxu0
        %v2123 = vadd.f32 0.0, %v2122
        %v2124 = vpop.f32.mrb[0].mxu0
        %v2125 = vpop.f32.mrb[0].mxu0
        %v2126 = vadd.f32 0.0, %v2125
        %v2127 = vpop.f32.mrb[0].mxu0
        %2128 = vmatprep.mubr.bf16.mxu0 0
        %2129 = vmatmul.mubr.bf16.gmra.mrb[0].mxu0 %v921
        %v2130 = vpop.f32.mrb[0].mxu0
        %v2131 = vadd.f32 0.0, %v2130
        %v2132 = vpop.f32.mrb[0].mxu0
        %v2133 = vpop.f32.mrb[0].mxu0
        %v2134 = vadd.f32 0.0, %v2133
        %v2135 = vpop.f32.mrb[0].mxu0
        %2136 = vmatprep.mubr.bf16.mxu0 0
        %2137 = vmatmul.mubr.bf16.gmra.mrb[0].mxu0 %v923
        %v2138 = vpop.f32.mrb[0].mxu0
        %v2139 = vadd.f32 0.0, %v2138
        %v2140 = vpop.f32.mrb[0].mxu0
        %v2141 = vpop.f32.mrb[0].mxu0
        %v2142 = vadd.f32 0.0, %v2141
        %v2143 = vpop.f32.mrb[0].mxu0
        %2144 = vmatprep.mubr.bf16.mxu0 0
        %2145 = vmatmul.mubr.bf16.gmra.mrb[0].mxu0 %v925
        %v2146 = vpop.f32.mrb[0].mxu0
        %v2147 = vadd.f32 0.0, %v2146
        %v2148 = vpop.f32.mrb[0].mxu0
        %v2149 = vpop.f32.mrb[0].mxu0
        %v2150 = vadd.f32 0.0, %v2149
        %v2151 = vpop.f32.mrb[0].mxu0
        %2152 = vmatprep.mubr.bf16.mxu0 0
        %2153 = vmatmul.mubr.bf16.gmra.mrb[0].mxu0 %v927
        %v2154 = vpop.f32.mrb[0].mxu0
        %v2155 = vadd.f32 0.0, %v2154
        %v2156 = vpop.f32.mrb[0].mxu0
        %v2157 = vpop.f32.mrb[0].mxu0
        %v2158 = vadd.f32 0.0, %v2157
        %v2159 = vpop.f32.mrb[0].mxu0
        %2160 = vmatprep.mubr.bf16.mxu0 0
        %2161 = vmatmul.mubr.bf16.gmra.mrb[0].mxu0 %v929
        %v2162 = vpop.f32.mrb[0].mxu0
        %v2163 = vadd.f32 0.0, %v2162
        %v2164 = vpop.f32.mrb[0].mxu0
        %v2165 = vpop.f32.mrb[0].mxu0
        %v2166 = vadd.f32 0.0, %v2165
        %v2167 = vpop.f32.mrb[0].mxu0
        %2168 = vmatprep.mubr.bf16.mxu0 0
        %2169 = vmatmul.mubr.bf16.gmra.mrb[0].mxu0 %v931
        %v2170 = vpop.f32.mrb[0].mxu0
        %v2171 = vadd.f32 0.0, %v2170
        %v2172 = vpop.f32.mrb[0].mxu0
        %v2173 = vpop.f32.mrb[0].mxu0
        %v2174 = vadd.f32 0.0, %v2173
        %v2175 = vpop.f32.mrb[0].mxu0
        %2176 = vmatprep.mubr.bf16.mxu0 0
        %2177 = vmatmul.mubr.bf16.gmra.mrb[0].mxu0 %v933
        %v2178 = vpop.f32.mrb[0].mxu0
        %v2179 = vadd.f32 0.0, %v2178
        %v2180 = vpop.f32.mrb[0].mxu0
        %v2181 = vpop.f32.mrb[0].mxu0
        %v2182 = vadd.f32 0.0, %v2181
        %v2183 = vpop.f32.mrb[0].mxu0
        %2184 = vmatprep.mubr.bf16.mxu0 0
        %2185 = vmatmul.mubr.bf16.gmra.mrb[0].mxu0 %v935
        %v2186 = vpop.f32.mrb[0].mxu0
        %v2187 = vadd.f32 0.0, %v2186
        %v2188 = vpop.f32.mrb[0].mxu0
        %v2189 = vpop.f32.mrb[0].mxu0
        %v2190 = vadd.f32 0.0, %v2189
        %v2191 = vpop.f32.mrb[0].mxu0
        %2192 = vmatprep.mubr.bf16.mxu0 0
        %2193 = vmatmul.mubr.bf16.gmra.mrb[0].mxu0 %v1413
        %v2194 = vpop.f32.mrb[0].mxu0
        %v2195 = vadd.f32 0.0, %v2194
        %v2196 = vpop.f32.mrb[0].mxu0
        %v2197 = vpop.f32.mrb[0].mxu0
        %v2198 = vadd.f32 0.0, %v2197
        %v2199 = vpop.f32.mrb[0].mxu0
        %2200 = vmatprep.mubr.bf16.mxu0 0
        %2201 = vmatmul.mubr.bf16.gmra.mrb[0].mxu0 %v1416
        %v2202 = vpop.f32.mrb[0].mxu0
        %v2203 = vadd.f32 0.0, %v2202
        %v2204 = vpop.f32.mrb[0].mxu0
        %v2205 = vpop.f32.mrb[0].mxu0
        %v2206 = vadd.f32 0.0, %v2205
        %v2207 = vpop.f32.mrb[0].mxu0
        %2208 = vmatprep.mubr.bf16.mxu0 0
        %2209 = vmatmul.mubr.bf16.gmra.mrb[0].mxu0 %v2059
        %v2210 = vpop.f32.mrb[0].mxu0
        %v2211 = vadd.f32 0.0, %v2210
        %v2212 = vpop.f32.mrb[0].mxu0
        %v2213 = vpop.f32.mrb[0].mxu0
        %v2214 = vadd.f32 0.0, %v2213
        %v2215 = vpop.f32.mrb[0].mxu0
        %2216 = vmatprep.mubr.bf16.mxu0 0
        %2217 = vmatmul.mubr.bf16.gmra.mrb[0].mxu0 %v2062
        %v2218 = vpop.f32.mrb[0].mxu0
        %v2219 = vadd.f32 0.0, %v2218
        %v2220 = vpop.f32.mrb[0].mxu0
        %v2221 = vpop.f32.mrb[0].mxu0
        %v2222 = vadd.f32 0.0, %v2221
        %v2223 = vpop.f32.mrb[0].mxu0
        %2224 = vdwg.mxu0
        %v2225 = vadd.f32 %v2018, %v2099
        %v2226 = vadd.f32 %v2019, %v2102
        %v2227 = vadd.f32 %v2020, %v2107
        %v2228 = vadd.f32 %v2021, %v2110
        %v2229 = vadd.f32 %v2022, %v2115
        %v2230 = vadd.f32 %v2023, %v2118
        %v2231 = vadd.f32 %v2024, %v2123
        %v2232 = vadd.f32 %v2025, %v2126
        %v2233 = vadd.f32 %v2026, %v2131
        %v2234 = vadd.f32 %v2027, %v2134
        %v2235 = vadd.f32 %v2028, %v2139
        %v2236 = vadd.f32 %v2029, %v2142
        %v2237 = vadd.f32 %v2030, %v2147
        %v2238 = vadd.f32 %v2031, %v2150
        %v2239 = vadd.f32 %v2032, %v2155
        %v2240 = vadd.f32 %v2033, %v2158
        %v2241 = vadd.f32 %v2034, %v2163
        %v2242 = vadd.f32 %v2035, %v2166
        %v2243 = vadd.f32 %v2036, %v2171
        %v2244 = vadd.f32 %v2037, %v2174
        %v2245 = vadd.f32 %v2038, %v2179
        %v2246 = vadd.f32 %v2039, %v2182
        %v2247 = vadd.f32 %v2040, %v2187
        %v2248 = vadd.f32 %v2041, %v2190
        %v2249 = vadd.f32 %v2042, %v2195
        %v2250 = vadd.f32 %v2043, %v2198
        %v2251 = vadd.f32 %v2044, %v2203
        %v2252 = vadd.f32 %v2045, %v2206
        %v2253 = vadd.f32 %v2046, %v2211
        %v2254 = vadd.f32 %v2047, %v2214
        %v2255 = vadd.f32 %v2048, %v2219
        %v2256 = vadd.f32 %v2049, %v2222
        %v2257 = vshrl.u32 %v507, 16
        %v2259 = vshll.u32 %v507, 16
        %v2261 = vrot.slane %v2259, 1
        %v2262 = vor.u32 %v2257, %v2261
        %v2263 = vshll.u32 %v475, 16
        %v2265 = vrot.slane %v2263, 1
        %v2266 = vsel %vm520, %v2262, %v2265
        %v2267 = vshrl.u32 %v475, 16
        %v2269 = vor.u32 %v2267, %v2265
        %v2271 = vshll.u32 %v517, 16
        %v2273 = vrot.slane %v2271, 1
        %v2274 = vsel %vm520, %v2269, %v2273
        %v2275 = vld [vmem:[%s2 + $0x38] sm:$0xf]
        %v2276 = vld [vmem:[%s2 + $0x3c] sm:$0xf]
        %v2279 = vunpack.c.l.b16 %v2275
        %v2280 = vunpack.c.l.b16 %v2276
        %v2281 = vpack.c.b16 %v2280, %v2279
        %v2284 = vsel %vm689, %v2266, 0
        %v2287 = vsel %vm689, %v2274, 0
        %2289 = vmatprep.subr.bf16.mxu0 0
        %2290 = vmatpush1.bf16.msra.mxu0 %v2281
        %2291 = vmatprep.subr.bf16.mxu0 0
        %2292 = vmatpush1.bf16.msra.mxu0 0
        %2293 = vmatprep.subr.bf16.mxu0 0
        %2294 = vmatpush1.bf16.msra.mxu0 0
        %2295 = vmatprep.subr.bf16.mxu0 0
        %2296 = vmatpush1.bf16.msra.mxu0 0
        %2297 = vmatprep.subr.bf16.mxu0 0
        %2298 = vmatpush1.bf16.msra.mxu0 0
        %2299 = vmatprep.subr.bf16.mxu0 0
        %2300 = vmatpush1.bf16.msra.mxu0 0
        %2301 = vmatprep.subr.bf16.mxu0 0
        %2302 = vmatpush1.bf16.msra.mxu0 0
        %2303 = vmatprep.subr.bf16.mxu0 0
        %2304 = vmatpush1.bf16.msra.mxu0 0
        %2305 = vmatprep.subr.bf16.mxu0 0
        %2306 = vmatpush1.bf16.msra.mxu0 0
        %2307 = vmatprep.subr.bf16.mxu0 0
        %2308 = vmatpush1.bf16.msra.mxu0 0
        %2309 = vmatprep.subr.bf16.mxu0 0
        %2310 = vmatpush1.bf16.msra.mxu0 0
        %2311 = vmatprep.subr.bf16.mxu0 0
        %2312 = vmatpush1.bf16.msra.mxu0 0
        %2313 = vmatprep.subr.bf16.mxu0 0
        %2314 = vmatpush1.bf16.msra.mxu0 0
        %2315 = vmatprep.subr.bf16.mxu0 0
        %2316 = vmatpush1.bf16.msra.mxu0 0
        %2317 = vmatprep.subr.bf16.mxu0 0
        %2318 = vmatpush1.bf16.msra.mxu0 0
        %2319 = vmatprep.subr.bf16.mxu0 0
        %2320 = vmatpush1.bf16.msra.mxu0 0
        %2321 = vmatprep.mubr.bf16.mxu0 0
        %2322 = vmatmul.mubr.bf16.gmra.mrb[0].mxu0 %v703
        %v2323 = vpop.f32.mrb[0].mxu0
        %v2324 = vadd.f32 0.0, %v2323
        %v2325 = vpop.f32.mrb[0].mxu0
        %v2326 = vpop.f32.mrb[0].mxu0
        %v2327 = vadd.f32 0.0, %v2326
        %v2328 = vpop.f32.mrb[0].mxu0
        %2329 = vmatprep.mubr.bf16.mxu0 0
        %2330 = vmatmul.mubr.bf16.gmra.mrb[0].mxu0 %v706
        %v2331 = vpop.f32.mrb[0].mxu0
        %v2332 = vadd.f32 0.0, %v2331
        %v2333 = vpop.f32.mrb[0].mxu0
        %v2334 = vpop.f32.mrb[0].mxu0
        %v2335 = vadd.f32 0.0, %v2334
        %v2336 = vpop.f32.mrb[0].mxu0
        %2337 = vmatprep.mubr.bf16.mxu0 0
        %2338 = vmatmul.mubr.bf16.gmra.mrb[0].mxu0 %v709
        %v2339 = vpop.f32.mrb[0].mxu0
        %v2340 = vadd.f32 0.0, %v2339
        %v2341 = vpop.f32.mrb[0].mxu0
        %v2342 = vpop.f32.mrb[0].mxu0
        %v2343 = vadd.f32 0.0, %v2342
        %v2344 = vpop.f32.mrb[0].mxu0
        %2345 = vmatprep.mubr.bf16.mxu0 0
        %2346 = vmatmul.mubr.bf16.gmra.mrb[0].mxu0 %v712
        %v2347 = vpop.f32.mrb[0].mxu0
        %v2348 = vadd.f32 0.0, %v2347
        %v2349 = vpop.f32.mrb[0].mxu0
        %v2350 = vpop.f32.mrb[0].mxu0
        %v2351 = vadd.f32 0.0, %v2350
        %v2352 = vpop.f32.mrb[0].mxu0
        %2353 = vmatprep.mubr.bf16.mxu0 0
        %2354 = vmatmul.mubr.bf16.gmra.mrb[0].mxu0 %v715
        %v2355 = vpop.f32.mrb[0].mxu0
        %v2356 = vadd.f32 0.0, %v2355
        %v2357 = vpop.f32.mrb[0].mxu0
        %v2358 = vpop.f32.mrb[0].mxu0
        %v2359 = vadd.f32 0.0, %v2358
        %v2360 = vpop.f32.mrb[0].mxu0
        %2361 = vmatprep.mubr.bf16.mxu0 0
        %2362 = vmatmul.mubr.bf16.gmra.mrb[0].mxu0 %v718
        %v2363 = vpop.f32.mrb[0].mxu0
        %v2364 = vadd.f32 0.0, %v2363
        %v2365 = vpop.f32.mrb[0].mxu0
        %v2366 = vpop.f32.mrb[0].mxu0
        %v2367 = vadd.f32 0.0, %v2366
        %v2368 = vpop.f32.mrb[0].mxu0
        %2369 = vmatprep.mubr.bf16.mxu0 0
        %2370 = vmatmul.mubr.bf16.gmra.mrb[0].mxu0 %v721
        %v2371 = vpop.f32.mrb[0].mxu0
        %v2372 = vadd.f32 0.0, %v2371
        %v2373 = vpop.f32.mrb[0].mxu0
        %v2374 = vpop.f32.mrb[0].mxu0
        %v2375 = vadd.f32 0.0, %v2374
        %v2376 = vpop.f32.mrb[0].mxu0
        %2377 = vmatprep.mubr.bf16.mxu0 0
        %2378 = vmatmul.mubr.bf16.gmra.mrb[0].mxu0 %v724
        %v2379 = vpop.f32.mrb[0].mxu0
        %v2380 = vadd.f32 0.0, %v2379
        %v2381 = vpop.f32.mrb[0].mxu0
        %v2382 = vpop.f32.mrb[0].mxu0
        %v2383 = vadd.f32 0.0, %v2382
        %v2384 = vpop.f32.mrb[0].mxu0
        %2385 = vmatprep.mubr.bf16.mxu0 0
        %2386 = vmatmul.mubr.bf16.gmra.mrb[0].mxu0 %v727
        %v2387 = vpop.f32.mrb[0].mxu0
        %v2388 = vadd.f32 0.0, %v2387
        %v2389 = vpop.f32.mrb[0].mxu0
        %v2390 = vpop.f32.mrb[0].mxu0
        %v2391 = vadd.f32 0.0, %v2390
        %v2392 = vpop.f32.mrb[0].mxu0
        %2393 = vmatprep.mubr.bf16.mxu0 0
        %2394 = vmatmul.mubr.bf16.gmra.mrb[0].mxu0 %v730
        %v2395 = vpop.f32.mrb[0].mxu0
        %v2396 = vadd.f32 0.0, %v2395
        %v2397 = vpop.f32.mrb[0].mxu0
        %v2398 = vpop.f32.mrb[0].mxu0
        %v2399 = vadd.f32 0.0, %v2398
        %v2400 = vpop.f32.mrb[0].mxu0
        %2401 = vmatprep.mubr.bf16.mxu0 0
        %2402 = vmatmul.mubr.bf16.gmra.mrb[0].mxu0 %v733
        %v2403 = vpop.f32.mrb[0].mxu0
        %v2404 = vadd.f32 0.0, %v2403
        %v2405 = vpop.f32.mrb[0].mxu0
        %v2406 = vpop.f32.mrb[0].mxu0
        %v2407 = vadd.f32 0.0, %v2406
        %v2408 = vpop.f32.mrb[0].mxu0
        %2409 = vmatprep.mubr.bf16.mxu0 0
        %2410 = vmatmul.mubr.bf16.gmra.mrb[0].mxu0 %v736
        %v2411 = vpop.f32.mrb[0].mxu0
        %v2412 = vadd.f32 0.0, %v2411
        %v2413 = vpop.f32.mrb[0].mxu0
        %v2414 = vpop.f32.mrb[0].mxu0
        %v2415 = vadd.f32 0.0, %v2414
        %v2416 = vpop.f32.mrb[0].mxu0
        %2417 = vmatprep.mubr.bf16.mxu0 0
        %2418 = vmatmul.mubr.bf16.gmra.mrb[0].mxu0 %v1638
        %v2419 = vpop.f32.mrb[0].mxu0
        %v2420 = vadd.f32 0.0, %v2419
        %v2421 = vpop.f32.mrb[0].mxu0
        %v2422 = vpop.f32.mrb[0].mxu0
        %v2423 = vadd.f32 0.0, %v2422
        %v2424 = vpop.f32.mrb[0].mxu0
        %2425 = vmatprep.mubr.bf16.mxu0 0
        %2426 = vmatmul.mubr.bf16.gmra.mrb[0].mxu0 %v1641
        %v2427 = vpop.f32.mrb[0].mxu0
        %v2428 = vadd.f32 0.0, %v2427
        %v2429 = vpop.f32.mrb[0].mxu0
        %v2430 = vpop.f32.mrb[0].mxu0
        %v2431 = vadd.f32 0.0, %v2430
        %v2432 = vpop.f32.mrb[0].mxu0
        %2433 = vmatprep.mubr.bf16.mxu0 0
        %2434 = vmatmul.mubr.bf16.gmra.mrb[0].mxu0 %v2284
        %v2435 = vpop.f32.mrb[0].mxu0
        %v2436 = vadd.f32 0.0, %v2435
        %v2437 = vpop.f32.mrb[0].mxu0
        %v2438 = vpop.f32.mrb[0].mxu0
        %v2439 = vadd.f32 0.0, %v2438
        %v2440 = vpop.f32.mrb[0].mxu0
        %2441 = vmatprep.mubr.bf16.mxu0 0
        %2442 = vmatmul.mubr.bf16.gmra.mrb[0].mxu0 %v2287
        %v2443 = vpop.f32.mrb[0].mxu0
        %v2444 = vadd.f32 0.0, %v2443
        %v2445 = vpop.f32.mrb[0].mxu0
        %v2446 = vpop.f32.mrb[0].mxu0
        %v2447 = vadd.f32 0.0, %v2446
        %v2448 = vpop.f32.mrb[0].mxu0
        %2449 = vdwg.mxu0
        %v2450 = vadd.f32 %v2225, %v2324
        %v2451 = vadd.f32 %v2226, %v2327
        %v2452 = vadd.f32 %v2227, %v2332
        %v2453 = vadd.f32 %v2228, %v2335
        %v2454 = vadd.f32 %v2229, %v2340
        %v2455 = vadd.f32 %v2230, %v2343
        %v2456 = vadd.f32 %v2231, %v2348
        %v2457 = vadd.f32 %v2232, %v2351
        %v2458 = vadd.f32 %v2233, %v2356
        %v2459 = vadd.f32 %v2234, %v2359
        %v2460 = vadd.f32 %v2235, %v2364
        %v2461 = vadd.f32 %v2236, %v2367
        %v2462 = vadd.f32 %v2237, %v2372
        %v2463 = vadd.f32 %v2238, %v2375
        %v2464 = vadd.f32 %v2239, %v2380
        %v2465 = vadd.f32 %v2240, %v2383
        %v2466 = vadd.f32 %v2241, %v2388
        %v2467 = vadd.f32 %v2242, %v2391
        %v2468 = vadd.f32 %v2243, %v2396
        %v2469 = vadd.f32 %v2244, %v2399
        %v2470 = vadd.f32 %v2245, %v2404
        %v2471 = vadd.f32 %v2246, %v2407
        %v2472 = vadd.f32 %v2247, %v2412
        %v2473 = vadd.f32 %v2248, %v2415
        %v2474 = vadd.f32 %v2249, %v2420
        %v2475 = vadd.f32 %v2250, %v2423
        %v2476 = vadd.f32 %v2251, %v2428
        %v2477 = vadd.f32 %v2252, %v2431
        %v2478 = vadd.f32 %v2253, %v2436
        %v2479 = vadd.f32 %v2254, %v2439
        %v2480 = vadd.f32 %v2255, %v2444
        %v2481 = vadd.f32 %v2256, %v2447
        %v2484 = vrot.slane %v507, 1
        %v2485 = vrot.slane %v475, 1
        %v2486 = vsel %vm1114, %v2484, %v2485
        %v2487 = vrot.slane %v517, 1
        %v2488 = vsel %vm1114, %v2485, %v2487
        %v2489 = vld [vmem:[%s2 + $0x40] sm:$0xf]
        %v2490 = vld [vmem:[%s2 + $0x44] sm:$0xf]
        %v2493 = vunpack.c.l.b16 %v2489
        %v2494 = vunpack.c.l.b16 %v2490
        %v2495 = vpack.c.b16 %v2494, %v2493
        %v2498 = vsel %vm689, %v2486, 0
        %v2501 = vsel %vm689, %v2488, 0
        %2503 = vmatprep.subr.bf16.mxu0 0
        %2504 = vmatpush1.bf16.msra.mxu0 %v2495
        %2505 = vmatprep.subr.bf16.mxu0 0
        %2506 = vmatpush1.bf16.msra.mxu0 0
        %2507 = vmatprep.subr.bf16.mxu0 0
        %2508 = vmatpush1.bf16.msra.mxu0 0
        %2509 = vmatprep.subr.bf16.mxu0 0
        %2510 = vmatpush1.bf16.msra.mxu0 0
        %2511 = vmatprep.subr.bf16.mxu0 0
        %2512 = vmatpush1.bf16.msra.mxu0 0
        %2513 = vmatprep.subr.bf16.mxu0 0
        %2514 = vmatpush1.bf16.msra.mxu0 0
        %2515 = vmatprep.subr.bf16.mxu0 0
        %2516 = vmatpush1.bf16.msra.mxu0 0
        %2517 = vmatprep.subr.bf16.mxu0 0
        %2518 = vmatpush1.bf16.msra.mxu0 0
        %2519 = vmatprep.subr.bf16.mxu0 0
        %2520 = vmatpush1.bf16.msra.mxu0 0
        %2521 = vmatprep.subr.bf16.mxu0 0
        %2522 = vmatpush1.bf16.msra.mxu0 0
        %2523 = vmatprep.subr.bf16.mxu0 0
        %2524 = vmatpush1.bf16.msra.mxu0 0
        %2525 = vmatprep.subr.bf16.mxu0 0
        %2526 = vmatpush1.bf16.msra.mxu0 0
        %2527 = vmatprep.subr.bf16.mxu0 0
        %2528 = vmatpush1.bf16.msra.mxu0 0
        %2529 = vmatprep.subr.bf16.mxu0 0
        %2530 = vmatpush1.bf16.msra.mxu0 0
        %2531 = vmatprep.subr.bf16.mxu0 0
        %2532 = vmatpush1.bf16.msra.mxu0 0
        %2533 = vmatprep.subr.bf16.mxu0 0
        %2534 = vmatpush1.bf16.msra.mxu0 0
        %2535 = vmatprep.mubr.bf16.mxu0 0
        %2536 = vmatmul.mubr.bf16.gmra.mrb[0].mxu0 %v1176
        %v2537 = vpop.f32.mrb[0].mxu0
        %v2538 = vadd.f32 0.0, %v2537
        %v2539 = vpop.f32.mrb[0].mxu0
        %v2540 = vpop.f32.mrb[0].mxu0
        %v2541 = vadd.f32 0.0, %v2540
        %v2542 = vpop.f32.mrb[0].mxu0
        %2543 = vmatprep.mubr.bf16.mxu0 0
        %2544 = vmatmul.mubr.bf16.gmra.mrb[0].mxu0 %v1179
        %v2545 = vpop.f32.mrb[0].mxu0
        %v2546 = vadd.f32 0.0, %v2545
        %v2547 = vpop.f32.mrb[0].mxu0
        %v2548 = vpop.f32.mrb[0].mxu0
        %v2549 = vadd.f32 0.0, %v2548
        %v2550 = vpop.f32.mrb[0].mxu0
        %2551 = vmatprep.mubr.bf16.mxu0 0
        %2552 = vmatmul.mubr.bf16.gmra.mrb[0].mxu0 %v1182
        %v2553 = vpop.f32.mrb[0].mxu0
        %v2554 = vadd.f32 0.0, %v2553
        %v2555 = vpop.f32.mrb[0].mxu0
        %v2556 = vpop.f32.mrb[0].mxu0
        %v2557 = vadd.f32 0.0, %v2556
        %v2558 = vpop.f32.mrb[0].mxu0
        %2559 = vmatprep.mubr.bf16.mxu0 0
        %2560 = vmatmul.mubr.bf16.gmra.mrb[0].mxu0 %v1185
        %v2561 = vpop.f32.mrb[0].mxu0
        %v2562 = vadd.f32 0.0, %v2561
        %v2563 = vpop.f32.mrb[0].mxu0
        %v2564 = vpop.f32.mrb[0].mxu0
        %v2565 = vadd.f32 0.0, %v2564
        %v2566 = vpop.f32.mrb[0].mxu0
        %2567 = vmatprep.mubr.bf16.mxu0 0
        %2568 = vmatmul.mubr.bf16.gmra.mrb[0].mxu0 %v1188
        %v2569 = vpop.f32.mrb[0].mxu0
        %v2570 = vadd.f32 0.0, %v2569
        %v2571 = vpop.f32.mrb[0].mxu0
        %v2572 = vpop.f32.mrb[0].mxu0
        %v2573 = vadd.f32 0.0, %v2572
        %v2574 = vpop.f32.mrb[0].mxu0
        %2575 = vmatprep.mubr.bf16.mxu0 0
        %2576 = vmatmul.mubr.bf16.gmra.mrb[0].mxu0 %v1191
        %v2577 = vpop.f32.mrb[0].mxu0
        %v2578 = vadd.f32 0.0, %v2577
        %v2579 = vpop.f32.mrb[0].mxu0
        %v2580 = vpop.f32.mrb[0].mxu0
        %v2581 = vadd.f32 0.0, %v2580
        %v2582 = vpop.f32.mrb[0].mxu0
        %2583 = vmatprep.mubr.bf16.mxu0 0
        %2584 = vmatmul.mubr.bf16.gmra.mrb[0].mxu0 %v1194
        %v2585 = vpop.f32.mrb[0].mxu0
        %v2586 = vadd.f32 0.0, %v2585
        %v2587 = vpop.f32.mrb[0].mxu0
        %v2588 = vpop.f32.mrb[0].mxu0
        %v2589 = vadd.f32 0.0, %v2588
        %v2590 = vpop.f32.mrb[0].mxu0
        %2591 = vmatprep.mubr.bf16.mxu0 0
        %2592 = vmatmul.mubr.bf16.gmra.mrb[0].mxu0 %v1197
        %v2593 = vpop.f32.mrb[0].mxu0
        %v2594 = vadd.f32 0.0, %v2593
        %v2595 = vpop.f32.mrb[0].mxu0
        %v2596 = vpop.f32.mrb[0].mxu0
        %v2597 = vadd.f32 0.0, %v2596
        %v2598 = vpop.f32.mrb[0].mxu0
        %2599 = vmatprep.mubr.bf16.mxu0 0
        %2600 = vmatmul.mubr.bf16.gmra.mrb[0].mxu0 %v1200
        %v2601 = vpop.f32.mrb[0].mxu0
        %v2602 = vadd.f32 0.0, %v2601
        %v2603 = vpop.f32.mrb[0].mxu0
        %v2604 = vpop.f32.mrb[0].mxu0
        %v2605 = vadd.f32 0.0, %v2604
        %v2606 = vpop.f32.mrb[0].mxu0
        %2607 = vmatprep.mubr.bf16.mxu0 0
        %2608 = vmatmul.mubr.bf16.gmra.mrb[0].mxu0 %v1203
        %v2609 = vpop.f32.mrb[0].mxu0
        %v2610 = vadd.f32 0.0, %v2609
        %v2611 = vpop.f32.mrb[0].mxu0
        %v2612 = vpop.f32.mrb[0].mxu0
        %v2613 = vadd.f32 0.0, %v2612
        %v2614 = vpop.f32.mrb[0].mxu0
        %2615 = vmatprep.mubr.bf16.mxu0 0
        %2616 = vmatmul.mubr.bf16.gmra.mrb[0].mxu0 %v1206
        %v2617 = vpop.f32.mrb[0].mxu0
        %v2618 = vadd.f32 0.0, %v2617
        %v2619 = vpop.f32.mrb[0].mxu0
        %v2620 = vpop.f32.mrb[0].mxu0
        %v2621 = vadd.f32 0.0, %v2620
        %v2622 = vpop.f32.mrb[0].mxu0
        %2623 = vmatprep.mubr.bf16.mxu0 0
        %2624 = vmatmul.mubr.bf16.gmra.mrb[0].mxu0 %v1209
        %v2625 = vpop.f32.mrb[0].mxu0
        %v2626 = vadd.f32 0.0, %v2625
        %v2627 = vpop.f32.mrb[0].mxu0
        %v2628 = vpop.f32.mrb[0].mxu0
        %v2629 = vadd.f32 0.0, %v2628
        %v2630 = vpop.f32.mrb[0].mxu0
        %2631 = vmatprep.mubr.bf16.mxu0 0
        %2632 = vmatmul.mubr.bf16.gmra.mrb[0].mxu0 %v1852
        %v2633 = vpop.f32.mrb[0].mxu0
        %v2634 = vadd.f32 0.0, %v2633
        %v2635 = vpop.f32.mrb[0].mxu0
        %v2636 = vpop.f32.mrb[0].mxu0
        %v2637 = vadd.f32 0.0, %v2636
        %v2638 = vpop.f32.mrb[0].mxu0
        %2639 = vmatprep.mubr.bf16.mxu0 0
        %2640 = vmatmul.mubr.bf16.gmra.mrb[0].mxu0 %v1855
        %v2641 = vpop.f32.mrb[0].mxu0
        %v2642 = vadd.f32 0.0, %v2641
        %v2643 = vpop.f32.mrb[0].mxu0
        %v2644 = vpop.f32.mrb[0].mxu0
        %v2645 = vadd.f32 0.0, %v2644
        %v2646 = vpop.f32.mrb[0].mxu0
        %2647 = vmatprep.mubr.bf16.mxu0 0
        %2648 = vmatmul.mubr.bf16.gmra.mrb[0].mxu0 %v2498
        %v2649 = vpop.f32.mrb[0].mxu0
        %v2650 = vadd.f32 0.0, %v2649
        %v2651 = vpop.f32.mrb[0].mxu0
        %v2652 = vpop.f32.mrb[0].mxu0
        %v2653 = vadd.f32 0.0, %v2652
        %v2654 = vpop.f32.mrb[0].mxu0
        %2655 = vmatprep.mubr.bf16.mxu0 0
        %2656 = vmatmul.mubr.bf16.gmra.mrb[0].mxu0 %v2501
        %v2657 = vpop.f32.mrb[0].mxu0
        %v2658 = vadd.f32 0.0, %v2657
        %v2659 = vpop.f32.mrb[0].mxu0
        %v2660 = vpop.f32.mrb[0].mxu0
        %v2661 = vadd.f32 0.0, %v2660
        %v2662 = vpop.f32.mrb[0].mxu0
        %2663 = vdwg.mxu0
        %v2664 = vadd.f32 %v2450, %v2538
        %v2665 = vadd.f32 %v2451, %v2541
        %v2666 = vadd.f32 %v2452, %v2546
        %v2667 = vadd.f32 %v2453, %v2549
        %v2668 = vadd.f32 %v2454, %v2554
        %v2669 = vadd.f32 %v2455, %v2557
        %v2670 = vadd.f32 %v2456, %v2562
        %v2671 = vadd.f32 %v2457, %v2565
        %v2672 = vadd.f32 %v2458, %v2570
        %v2673 = vadd.f32 %v2459, %v2573
        %v2674 = vadd.f32 %v2460, %v2578
        %v2675 = vadd.f32 %v2461, %v2581
        %v2676 = vadd.f32 %v2462, %v2586
        %v2677 = vadd.f32 %v2463, %v2589
        %v2678 = vadd.f32 %v2464, %v2594
        %v2679 = vadd.f32 %v2465, %v2597
        %v2680 = vadd.f32 %v2466, %v2602
        %v2681 = vadd.f32 %v2467, %v2605
        %v2682 = vadd.f32 %v2468, %v2610
        %v2683 = vadd.f32 %v2469, %v2613
        %v2684 = vadd.f32 %v2470, %v2618
        %v2685 = vadd.f32 %v2471, %v2621
        %v2686 = vadd.f32 %v2472, %v2626
        %v2687 = vadd.f32 %v2473, %v2629
        %v2688 = vadd.f32 %v2474, %v2634
        %v2689 = vadd.f32 %v2475, %v2637
        %v2690 = vadd.f32 %v2476, %v2642
        %v2691 = vadd.f32 %v2477, %v2645
        %v2692 = vadd.f32 %v2478, %v2650
        %v2693 = vadd.f32 %v2479, %v2653
        %v2694 = vadd.f32 %v2480, %v2658
        %v2695 = vadd.f32 %v2481, %v2661
        %v2696 = vld [vmem:[%s3] sm:$0x1]
        %v2698 = vlaneseq
        %v2699 = vshrl.u32 %v2698, 7
        %v2700 = vsub.s32 0, %v2699
        %v2701 = vrot.slane %v2696, %v2700
        %v2703 = vadd.f32 %v2664, %v2701
        %v2704 = vadd.f32 %v2665, %v2701
        %v2705 = vadd.f32 %v2666, %v2701
        %v2706 = vadd.f32 %v2667, %v2701
        %v2707 = vadd.f32 %v2668, %v2701
        %v2708 = vadd.f32 %v2669, %v2701
        %v2709 = vadd.f32 %v2670, %v2701
        %v2710 = vadd.f32 %v2671, %v2701
        %v2711 = vadd.f32 %v2672, %v2701
        %v2712 = vadd.f32 %v2673, %v2701
        %v2713 = vadd.f32 %v2674, %v2701
        %v2714 = vadd.f32 %v2675, %v2701
        %v2715 = vadd.f32 %v2676, %v2701
        %v2716 = vadd.f32 %v2677, %v2701
        %v2717 = vadd.f32 %v2678, %v2701
        %v2718 = vadd.f32 %v2679, %v2701
        %v2719 = vadd.f32 %v2680, %v2701
        %v2720 = vadd.f32 %v2681, %v2701
        %v2721 = vadd.f32 %v2682, %v2701
        %v2722 = vadd.f32 %v2683, %v2701
        %v2723 = vadd.f32 %v2684, %v2701
        %v2724 = vadd.f32 %v2685, %v2701
        %v2725 = vadd.f32 %v2686, %v2701
        %v2726 = vadd.f32 %v2687, %v2701
        %v2727 = vadd.f32 %v2688, %v2701
        %v2728 = vadd.f32 %v2689, %v2701
        %v2729 = vadd.f32 %v2690, %v2701
        %v2730 = vadd.f32 %v2691, %v2701
        %v2731 = vadd.f32 %v2692, %v2701
        %v2732 = vadd.f32 %v2693, %v2701
        %v2733 = vadd.f32 %v2694, %v2701
        %v2734 = vadd.f32 %v2695, %v2701
        %vm2735 = vcmask 261120
        %2736 = vst.msk [vmem:[%s242] sm:$0xff] %vm2735, %v2703
        %2737 = vst.msk [vmem:[%s242 + $0x8] sm:$0xff] %vm2735, %v2704
        %2738 = vst.msk [vmem:[%s242 + $0x10] sm:$0xff] %vm2735, %v2705
        %2739 = vst.msk [vmem:[%s242 + $0x18] sm:$0xff] %vm2735, %v2706
        %2740 = vst.msk [vmem:[%s242 + $0x20] sm:$0xff] %vm2735, %v2707
        %2741 = vst.msk [vmem:[%s242 + $0x28] sm:$0xff] %vm2735, %v2708
        %2742 = vst.msk [vmem:[%s242 + $0x30] sm:$0xff] %vm2735, %v2709
        %2743 = vst.msk [vmem:[%s242 + $0x38] sm:$0xff] %vm2735, %v2710
        %2744 = vst.msk [vmem:[%s242 + $0x40] sm:$0xff] %vm2735, %v2711
        %2745 = vst.msk [vmem:[%s242 + $0x48] sm:$0xff] %vm2735, %v2712
        %2746 = vst.msk [vmem:[%s242 + $0x50] sm:$0xff] %vm2735, %v2713
        %2747 = vst.msk [vmem:[%s242 + $0x58] sm:$0xff] %vm2735, %v2714
        %2748 = vst.msk [vmem:[%s242 + $0x60] sm:$0xff] %vm2735, %v2715
        %2749 = vst.msk [vmem:[%s242 + $0x68] sm:$0xff] %vm2735, %v2716
        %2750 = vst.msk [vmem:[%s242 + $0x70] sm:$0xff] %vm2735, %v2717
        %2751 = vst.msk [vmem:[%s242 + $0x78] sm:$0xff] %vm2735, %v2718
        %2752 = vst.msk [vmem:[%s242 + $0x80] sm:$0xff] %vm2735, %v2719
        %2753 = vst.msk [vmem:[%s242 + $0x88] sm:$0xff] %vm2735, %v2720
        %2754 = vst.msk [vmem:[%s242 + $0x90] sm:$0xff] %vm2735, %v2721
        %2755 = vst.msk [vmem:[%s242 + $0x98] sm:$0xff] %vm2735, %v2722
        %2756 = vst.msk [vmem:[%s242 + $0xa0] sm:$0xff] %vm2735, %v2723
        %2757 = vst.msk [vmem:[%s242 + $0xa8] sm:$0xff] %vm2735, %v2724
        %2758 = vst.msk [vmem:[%s242 + $0xb0] sm:$0xff] %vm2735, %v2725
        %2759 = vst.msk [vmem:[%s242 + $0xb8] sm:$0xff] %vm2735, %v2726
        %2760 = vst.msk [vmem:[%s242 + $0xc0] sm:$0xff] %vm2735, %v2727
        %2761 = vst.msk [vmem:[%s242 + $0xc8] sm:$0xff] %vm2735, %v2728
        %2762 = vst.msk [vmem:[%s242 + $0xd0] sm:$0xff] %vm2735, %v2729
        %2763 = vst.msk [vmem:[%s242 + $0xd8] sm:$0xff] %vm2735, %v2730
        %2764 = vst.msk [vmem:[%s242 + $0xe0] sm:$0xff] %vm2735, %v2731
        %2765 = vst.msk [vmem:[%s242 + $0xe8] sm:$0xff] %vm2735, %v2732
        %2766 = vst.msk [vmem:[%s242 + $0xf0] sm:$0xff] %vm2735, %v2733
        %2767 = vst.msk [vmem:[%s242 + $0xf8] sm:$0xff] %vm2735, %v2734
        %s2768 = sand.u32 %s138, 1
        %s2769 = scalar_lea.sflag [#allocation3], %s2768
        %s2770 = sand.u32 %s138, 1
        %s2771 = smul.addr %s2770, 256
        %s2772 = scalar_lea.vmem [#allocation2], %s2771
        // Predicated region
        $region37: #{tpu_custom_call.1} parent=35 // pred_check
          %p2773 = pneg %p148
        $region38: #{tpu_custom_call.1} parent=35 // pred_check_branch
          %2775 = sbr.rel (%p2773) target = $region40
        $region39: #{tpu_custom_call.1} parent=35 // pred_region
          %s2776 = smul.u32 8, %s22
          %s2778 = ssub.s32 4096, 4096
          %2779 = vsyncadd %s2769, %s2778
          %s2780 = smul.addr %s2776, 4
          %s2781 = smul.addr %s23, 128
          %s2782 = sadd.s32 %s2780, %s2781
          %s2783 = smul.addr %s2782, 128
          %s2784 = scalar_lea.hbm %s4, %s2783
          %s2785 = sshll.u32 %s2772, 4
          %s2786 = int_to_ptr.vmem [resolvable:$true] %s2785
          %2791 = dma.vmem_to_hbm [thread:$0]  %s2786, 4096, %s2784, %s2769, 128, 128, 8
        $region40: #{tpu_custom_call.1} parent=35 // pred_fallthru
          _
      $region36: #{tpu_custom_call.1} parent=5 // pred_fallthru
        _
      %p2792 = scmp.le.s32.totalorder 2, %s13
      // Predicated region
      $region41: #{tpu_custom_call.1} parent=5 // pred_check
        %p2793 = pneg %p2792
      $region42: #{tpu_custom_call.1} parent=5 // pred_check_branch
        %2795 = sbr.rel (%p2793) target = $region44
      $region43: #{tpu_custom_call.1} parent=5 // pred_region
        %s2796 = ssub.s32 %s13, 2
        // Predicated region
        $region45: #{tpu_custom_call.1} parent=43 // pred_check
          %p2797 = pneg %p154
        $region46: #{tpu_custom_call.1} parent=43 // pred_check_branch
          %2799 = sbr.rel (%p2797) target = $region48
        $region47: #{tpu_custom_call.1} parent=43 // pred_region
          %s2800 = sand.u32 %s139, 1
          %s2801 = scalar_lea.sflag [#allocation3], %s2800
          %s2802 = sand.u32 %s139, 1
          %s2803 = smul.addr %s2802, 256
          %s2804 = scalar_lea.vmem [#allocation2], %s2803
          %2805 = dma.done %s2801, 4096
        $region48: #{tpu_custom_call.1} parent=43 // pred_fallthru
          _
      $region44: #{tpu_custom_call.1} parent=5 // pred_fallthru
        _
    $region6: #{tpu_custom_call.1} parent=1 // loop_footer
      %s17 = sadd.s32 1, %s13
    $region7: #{tpu_custom_call.1} parent=1 // loop_footer_branch
      %12 = sbr.rel target = $region3
    $region8: #{tpu_custom_call.1} parent=1 // loop_exit
      _
    %2806 = vsyncpa [#allocation3], 1
    %s2807 = scalar_lea.sflag [#allocation3], 1
    %2808 = vsyncpa %s2807, 1

</llo_original>
